<compile_context>
chip_gen: v7x
topology: tpu7x:2x2x1
jax: 0.10.0
libtpu: 0.0.40
codegen_flags: <defaults>
</compile_context>

<pallas_src>
import numpy as np

import jax
import jax.numpy as jnp
from jax.experimental import pallas as pl
from jax.experimental.pallas import tpu as pltpu


# ----------------------------------------------------------------------------
# Fused whole-network kernel (one batch element per grid step)
# ----------------------------------------------------------------------------
def _make_waveunet_kernel(depth, conv_per_block, kernel_size, use_bf16):
    K = kernel_size
    pad = (K - 1) // 2
    mxu_dtype = jnp.bfloat16 if use_bf16 else jnp.float32

    def shift_cols(x, t):
        # y[:, j] = x[:, j + t] for valid j + t, zero otherwise (t static).
        # Per-batch tiles: "out of sample" == "out of array", so zero fill is
        # exactly the conv's 'same' zero padding (no halo needed).
        C, M = x.shape
        if t == 0:
            return x
        if abs(t) >= M:
            return jnp.zeros_like(x)
        z = jnp.zeros((C, abs(t)), x.dtype)
        if t > 0:
            return jnp.concatenate([x[:, t:], z], axis=1)
        return jnp.concatenate([z, x[:, :M + t]], axis=1)

    def kernel(*refs):
        im2col = refs[-1]          # VMEM scratch (K*C_max, L) f32, reused
        o_ref = refs[-2]
        it = iter(refs[:-2])
        nxt = lambda: next(it)[...]

        x = nxt()                  # (C_pad, L) f32, one batch element
        L = x.shape[1]

        def conv_dilated(parts, b, stride, relu):
            # parts: list of (activation, wmat) with wmat (C_out, K*C_in).
            # Dilated 'same' conv at column spacing `stride`; one MXU matmul
            # per part over the shared im2col scratch; bias/ReLU in f32.
            acc = None
            for xin, w in parts:
                c_in = w.shape[1] // K
                xf = xin.astype(jnp.float32)
                for k in range(K):
                    im2col[k * c_in:(k + 1) * c_in, :] = shift_cols(
                        xf, (k - pad) * stride)
                y = jnp.dot(w, im2col[0:K * c_in, :].astype(mxu_dtype),
                            preferred_element_type=jnp.float32)
                acc = y if acc is None else acc + y
            acc = acc + b
            return jnp.maximum(acc, 0.0) if relu else acc

        # ------------------------------ encoder ------------------------------
        enc = []
        stride = 1
        for i in range(depth):
            for _ in range(conv_per_block):
                w = nxt(); b = nxt()
                x = conv_dilated([(x, w)], b, stride, relu=True)
            enc.append(x.astype(mxu_dtype))      # skip: matmul-only consumer
            if i < depth - 1:
                # MaxPool1d(2,2): pairwise max; valid columns now 2*stride apart.
                x = jnp.maximum(x, shift_cols(x, stride))
                stride *= 2

        # ------------------------------ decoder ------------------------------
        col = jax.lax.broadcasted_iota(jnp.int32, (1, L), 1)
        for d in range(depth - 1):
            w0 = nxt(); w1 = nxt(); bu = nxt()
            h = stride // 2
            xc = x.astype(mxu_dtype)
            y0 = jnp.dot(w0, xc, preferred_element_type=jnp.float32) + bu
            y1 = jnp.dot(w1, xc, preferred_element_type=jnp.float32) + bu
            # ConvTranspose1d(k=2, s=2): even output samples take y0, odd take
            # the previous column of y1.  Parity mask kills don't-care columns.
            mask = ((col & (stride - 1)) == 0).astype(jnp.float32)
            up = mask * y0 + shift_cols(mask * y1, -h)
            stride = h
            skip = enc[depth - 2 - d]
            for j in range(conv_per_block):
                if j == 0:
                    # concat-merge without the concat: split-weight accumulate.
                    wu_ = nxt(); ws_ = nxt(); b = nxt()
                    x = conv_dilated([(up, wu_), (skip, ws_)], b, stride, True)
                else:
                    w = nxt(); b = nxt()
                    x = conv_dilated([(x, w)], b, stride, True)

        # --------------------------- final 1x1 conv ---------------------------
        wf = nxt(); bf = nxt()
        y = jnp.dot(wf, x.astype(mxu_dtype),
                    preferred_element_type=jnp.float32) + bf
        o_ref[...] = y.astype(o_ref.dtype)

    return kernel


# ----------------------------------------------------------------------------
# Forward wrapper: batch grid, resident weights, VMEM-aware compiler params
# ----------------------------------------------------------------------------
def waveunet_forward(params, x, use_bf16=True):
    """x: (N, C_in, L) -> (N, C_out, L)."""
    N, C_in, L = x.shape
    depth = len(params["down"])
    cpb = len(params["down"][0]["block"])
    K = int(params["down"][0]["block"][0]["w"].shape[0])
    C_out_final = int(params["final"]["w"].shape[1])

    assert K % 2 == 1, "kernel_size must be odd for 'same' padding"
    assert L % (1 << (depth - 1)) == 0, "L must be divisible by 2**(depth-1)"

    mxu_dtype = jnp.bfloat16 if use_bf16 else jnp.float32
    C_pad = max(8, -(-C_in // 8) * 8)          # first-layer C_in padded to 8
    c_max = [C_pad]                            # widest conv C_in (scratch rows)

    def wmat(w, pad_ci_to=None):
        # (K, C_out, C_in) -> (C_out, K*C_in), column order k*C_in + c.
        k_, co, ci = w.shape
        if pad_ci_to is not None and pad_ci_to > ci:
            w = jnp.pad(w, ((0, 0), (0, 0), (0, pad_ci_to - ci)))
            ci = pad_ci_to
        assert ci % 8 == 0, "feature_channels must be a multiple of 8"
        c_max[0] = max(c_max[0], ci)
        return jnp.transpose(w, (1, 0, 2)).reshape(co, k_ * ci).astype(mxu_dtype)

    def bias(b):
        return b.astype(jnp.float32)           # bias/ReLU stay f32 (VPU)

    weights = []
    for i, lvl in enumerate(params["down"]):
        for j, conv in enumerate(lvl["block"]):
            weights += [wmat(conv["w"], C_pad if (i == 0 and j == 0) else None),
                        bias(conv["b"])]
    for lvl in params["up"]:
        wu = lvl["up"]["w"].astype(mxu_dtype)
        weights += [wu[0], wu[1], bias(lvl["up"]["b"])]
        for j, conv in enumerate(lvl["block"]):
            if j == 0:
                w = conv["w"]
                c_up = w.shape[2] // 2          # channels: [from_up, from_down]
                weights += [wmat(w[:, :, :c_up]), wmat(w[:, :, c_up:]),
                            bias(conv["b"])]
            else:
                weights += [wmat(conv["w"]), bias(conv["b"])]
    wf = params["final"]["w"]
    weights += [wf.reshape(wf.shape[1], wf.shape[2]).astype(mxu_dtype),
                bias(params["final"]["b"])]

    x_pad = x if C_pad == C_in else jnp.pad(x, ((0, 0), (0, C_pad - C_in), (0, 0)))

    # ---- VMEM budget: estimate working set, cap per generation. ----
    def _nbytes(a):
        return int(np.prod(a.shape)) * a.dtype.itemsize

    act_rows = C_pad
    act_rows += sum(int(c["w"].shape[1]) for lv in params["down"] for c in lv["block"])
    act_rows += sum(int(c["w"].shape[1]) for lv in params["up"] for c in lv["block"])
    est = 2 * (C_pad + C_out_final) * L * 4            # in/out double buffers
    est += 2 * sum(_nbytes(a) for a in weights)        # resident weights
    est += K * c_max[0] * L * 4                        # im2col scratch
    est += 4 * act_rows * L * 4                        # live activations + skips
    try:
        cap = int(pltpu.get_tpu_info().vmem_capacity_bytes)
    except Exception:
        cap = 128 << 20
    vmem_limit = int(min(max(2 * est, 32 << 20), (cap * 3) // 4))

    kernel = _make_waveunet_kernel(depth, cpb, K, use_bf16)
    return pl.pallas_call(
        kernel,
        out_shape=jax.ShapeDtypeStruct((N, C_out_final, L), jnp.float32),
        grid=(N,),
        in_specs=[pl.BlockSpec((None, C_pad, L), lambda n: (n, 0, 0))] +
                 [pl.BlockSpec(a.shape, lambda n: (0, 0)) for a in weights],
        out_specs=pl.BlockSpec((None, C_out_final, L), lambda n: (n, 0, 0)),
        scratch_shapes=[pltpu.VMEM((K * c_max[0], L), jnp.float32)],
        compiler_params=pltpu.CompilerParams(
            dimension_semantics=("parallel",),
            vmem_limit_bytes=vmem_limit),
    )(x_pad, *weights)


# ----------------------------------------------------------------------------
# Parameter construction (deterministic, PyTorch-like uniform init)
# ----------------------------------------------------------------------------
def _init_conv(key, c_in, c_out, k, fan_in=None):
    fan_in = c_in * k if fan_in is None else fan_in
    bound = 1.0 / float(np.sqrt(fan_in))
    kw, kb = jax.random.split(key)
    w = jax.random.uniform(kw, (k, c_out, c_in), jnp.float32, -bound, bound)
    b = jax.random.uniform(kb, (c_out, 1), jnp.float32, -bound, bound)
    return {"w": w, "b": b}


def init_waveunet_params(key, in_channels, out_channels, feature_channels,
                         depth, conv_per_block, kernel_size):
    params = {"down": [], "up": []}
    outs = in_channels
    for i in range(depth):                                     # encoder
        ins = in_channels if i == 0 else outs
        outs = feature_channels * (i + 1)
        convs = []
        for j in range(conv_per_block):
            key, sub = jax.random.split(key)
            convs.append(_init_conv(sub, ins if j == 0 else outs, outs,
                                    kernel_size))
        params["down"].append({"block": convs})
    for i in range(depth - 1):                                 # decoder
        ins = outs
        outs = ins - feature_channels
        key, sub = jax.random.split(key)
        up = _init_conv(sub, ins, outs, 2, fan_in=outs * 2)    # ConvTranspose1d
        convs = []
        for j in range(conv_per_block):
            key, sub = jax.random.split(key)
            convs.append(_init_conv(sub, outs * 2 if j == 0 else outs, outs,
                                    kernel_size))
        params["up"].append({"up": up, "block": convs})
    key, sub = jax.random.split(key)
    params["final"] = _init_conv(sub, outs, out_channels, 1)   # 1x1 conv
    return params


# ----------------------------------------------------------------------------
# Pure-JAX reference (mirrors PyTorch forward directly) for validation
# ----------------------------------------------------------------------------
def waveunet_reference(params, x):
    hi = jax.lax.Precision.HIGHEST

    def conv1d(x, w, b, relu):
        K, C_out, C_in = w.shape
        pad = (K - 1) // 2
        L = x.shape[-1]
        xp = jnp.pad(x, ((0, 0), (0, 0), (pad, pad)))
        y = jnp.zeros((x.shape[0], C_out, L), jnp.float32)
        for k in range(K):
            y = y + jnp.einsum("oc,ncl->nol", w[k], xp[:, :, k:k + L],
                               precision=hi)
        y = y + b[None]
        return jnp.maximum(y, 0.0) if relu else y

    depth = len(params["down"])
    enc = []
    for i, lvl in enumerate(params["down"]):
        for conv in lvl["block"]:
            x = conv1d(x, conv["w"], conv["b"], True)
        enc.append(x)
        if i < depth - 1:
            n_, c_, l_ = x.shape
            x = x.reshape(n_, c_, l_ // 2, 2).max(-1)
    for i, lvl in enumerate(params["up"]):
        w, b = lvl["up"]["w"], lvl["up"]["b"]
        y0 = jnp.einsum("oc,ncl->nol", w[0], x, precision=hi) + b[None]
        y1 = jnp.einsum("oc,ncl->nol", w[1], x, precision=hi) + b[None]
        up = jnp.stack([y0, y1], axis=-1).reshape(x.shape[0], w.shape[1], -1)
        x = jnp.concatenate([up, enc[-(i + 2)]], axis=1)
        for conv in lvl["block"]:
            x = conv1d(x, conv["w"], conv["b"], True)
    return conv1d(x, params["final"]["w"], params["final"]["b"], False)


# ----------------------------------------------------------------------------
if __name__ == "__main__":
    # Small config consistent with the module: depth=3, feature_channels=8,
    # conv_per_block=1, kernel_size=5, in/out channels = 1, batch=2, L=32.
    N, C_IN, C_OUT, L = 2, 1, 1, 32
    DEPTH, FEAT, CPB, K = 3, 8, 1, 5

    key = jax.random.PRNGKey(0)
    k_params, k_x = jax.random.split(key)
    params = init_waveunet_params(k_params, C_IN, C_OUT, FEAT, DEPTH, CPB, K)
    x = jax.random.normal(k_x, (N, C_IN, L), jnp.float32)

    y_ref = waveunet_reference(params, x)
    scale = float(jnp.max(jnp.abs(y_ref))) + 1e-6

    # Tight indexing/layout correctness check: f32-operand kernel path.
    y32 = jax.jit(lambda p, a: waveunet_forward(p, a, use_bf16=False))(params, x)
    jax.block_until_ready(y32)
    assert y32.shape == (N, C_OUT, L), y32.shape
    err32 = float(jnp.max(jnp.abs(y32 - y_ref)))
    assert err32 <= 5e-5 * scale + 1e-5, f"f32 path err {err32} (scale {scale})"

    # Performance path: bf16 MXU operands, f32 accumulation (bf16 rounding only).
    y16 = jax.jit(lambda p, a: waveunet_forward(p, a, use_bf16=True))(params, x)
    jax.block_until_ready(y16)
    assert y16.shape == (N, C_OUT, L), y16.shape
    assert bool(jnp.all(jnp.isfinite(y16)))
    err16 = float(jnp.max(jnp.abs(y16 - y_ref)))
    assert err16 <= 4e-2 * scale + 1e-3, f"bf16 path err {err16} (scale {scale})"

    print("KERNEL_OK")
</pallas_src>

<mosaic_0001>
module attributes {stable_mosaic.version = 11 : i64} {
  func.func @kernel(%arg0: i32, %arg1: memref<1x8x32xf32, #tpu.memory_space<vmem>>, %arg2: memref<8x40xf32, #tpu.memory_space<vmem>>, %arg3: memref<8x1xf32, #tpu.memory_space<vmem>>, %arg4: memref<16x40xf32, #tpu.memory_space<vmem>>, %arg5: memref<16x1xf32, #tpu.memory_space<vmem>>, %arg6: memref<24x80xf32, #tpu.memory_space<vmem>>, %arg7: memref<24x1xf32, #tpu.memory_space<vmem>>, %arg8: memref<16x24xf32, #tpu.memory_space<vmem>>, %arg9: memref<16x24xf32, #tpu.memory_space<vmem>>, %arg10: memref<16x1xf32, #tpu.memory_space<vmem>>, %arg11: memref<16x80xf32, #tpu.memory_space<vmem>>, %arg12: memref<16x80xf32, #tpu.memory_space<vmem>>, %arg13: memref<16x1xf32, #tpu.memory_space<vmem>>, %arg14: memref<8x16xf32, #tpu.memory_space<vmem>>, %arg15: memref<8x16xf32, #tpu.memory_space<vmem>>, %arg16: memref<8x1xf32, #tpu.memory_space<vmem>>, %arg17: memref<8x40xf32, #tpu.memory_space<vmem>>, %arg18: memref<8x40xf32, #tpu.memory_space<vmem>>, %arg19: memref<8x1xf32, #tpu.memory_space<vmem>>, %arg20: memref<1x8xf32, #tpu.memory_space<vmem>>, %arg21: memref<1x1xf32, #tpu.memory_space<vmem>>, %arg22: memref<1x1x32xf32, #tpu.memory_space<vmem>>, %arg23: memref<80x32xf32, #tpu.memory_space<vmem>>) attributes {dimension_semantics = [#tpu.dimension_semantics<parallel>], iteration_bounds = array<i64: 2>, scalar_prefetch = 0 : i64, scratch_operands = 1 : i64, tpu.core_type = #tpu.core_type<tc>, window_params = [{transform_indices = @transform_0, window_bounds = array<i64: 1, 8, 32>}, {pipeline_mode = #tpu.pipeline_mode<synchronous>, transform_indices = @transform_1, window_bounds = array<i64: 8, 40>}, {pipeline_mode = #tpu.pipeline_mode<synchronous>, transform_indices = @transform_2, window_bounds = array<i64: 8, 1>}, {pipeline_mode = #tpu.pipeline_mode<synchronous>, transform_indices = @transform_3, window_bounds = array<i64: 16, 40>}, {pipeline_mode = #tpu.pipeline_mode<synchronous>, transform_indices = @transform_4, window_bounds = array<i64: 16, 1>}, {pipeline_mode = #tpu.pipeline_mode<synchronous>, transform_indices = @transform_5, window_bounds = array<i64: 24, 80>}, {pipeline_mode = #tpu.pipeline_mode<synchronous>, transform_indices = @transform_6, window_bounds = array<i64: 24, 1>}, {pipeline_mode = #tpu.pipeline_mode<synchronous>, transform_indices = @transform_7, window_bounds = array<i64: 16, 24>}, {pipeline_mode = #tpu.pipeline_mode<synchronous>, transform_indices = @transform_8, window_bounds = array<i64: 16, 24>}, {pipeline_mode = #tpu.pipeline_mode<synchronous>, transform_indices = @transform_9, window_bounds = array<i64: 16, 1>}, {pipeline_mode = #tpu.pipeline_mode<synchronous>, transform_indices = @transform_10, window_bounds = array<i64: 16, 80>}, {pipeline_mode = #tpu.pipeline_mode<synchronous>, transform_indices = @transform_11, window_bounds = array<i64: 16, 80>}, {pipeline_mode = #tpu.pipeline_mode<synchronous>, transform_indices = @transform_12, window_bounds = array<i64: 16, 1>}, {pipeline_mode = #tpu.pipeline_mode<synchronous>, transform_indices = @transform_13, window_bounds = array<i64: 8, 16>}, {pipeline_mode = #tpu.pipeline_mode<synchronous>, transform_indices = @transform_14, window_bounds = array<i64: 8, 16>}, {pipeline_mode = #tpu.pipeline_mode<synchronous>, transform_indices = @transform_15, window_bounds = array<i64: 8, 1>}, {pipeline_mode = #tpu.pipeline_mode<synchronous>, transform_indices = @transform_16, window_bounds = array<i64: 8, 40>}, {pipeline_mode = #tpu.pipeline_mode<synchronous>, transform_indices = @transform_17, window_bounds = array<i64: 8, 40>}, {pipeline_mode = #tpu.pipeline_mode<synchronous>, transform_indices = @transform_18, window_bounds = array<i64: 8, 1>}, {pipeline_mode = #tpu.pipeline_mode<synchronous>, transform_indices = @transform_19, window_bounds = array<i64: 1, 8>}, {pipeline_mode = #tpu.pipeline_mode<synchronous>, transform_indices = @transform_20, window_bounds = array<i64: 1, 1>}, {transform_indices = @transform_21, window_bounds = array<i64: 1, 1, 32>}]} {
    %c0 = arith.constant 0 : index
    %c0_0 = arith.constant 0 : index
    %c0_1 = arith.constant 0 : index
    %0 = vector.load %arg1[%c0, %c0_0, %c0_1] : memref<1x8x32xf32, #tpu.memory_space<vmem>>, vector<1x8x32xf32>
    %1 = vector.shape_cast %0 : vector<1x8x32xf32> to vector<8x32xf32>
    %c0_2 = arith.constant 0 : index
    %c0_3 = arith.constant 0 : index
    %2 = vector.load %arg2[%c0_2, %c0_3] : memref<8x40xf32, #tpu.memory_space<vmem>>, vector<8x40xf32>
    %c0_4 = arith.constant 0 : index
    %c0_5 = arith.constant 0 : index
    %3 = vector.load %arg3[%c0_4, %c0_5] : memref<8x1xf32, #tpu.memory_space<vmem>>, vector<8x1xf32>
    %cst = arith.constant 0.000000e+00 : f32
    %4 = vector.broadcast %cst : f32 to vector<8x2xf32>
    %5 = vector.extract_strided_slice %1 {offsets = [0, 0], sizes = [8, 30], strides = [1, 1]} : vector<8x32xf32> to vector<8x30xf32>
    %6 = tpu.concatenate %4, %5 in 1 : vector<8x2xf32>, vector<8x30xf32> -> vector<8x32xf32>
    %c0_6 = arith.constant 0 : index
    %c0_7 = arith.constant 0 : index
    %7 = vector.load %arg23[%c0_6, %c0_7] : memref<80x32xf32, #tpu.memory_space<vmem>>, vector<8x32xf32>
    tpu.vector_store %arg23[%c0_6, %c0_7], %6 {strides = array<i32>} : memref<80x32xf32, #tpu.memory_space<vmem>>, vector<8x32xf32>,
    %cst_8 = arith.constant 0.000000e+00 : f32
    %8 = vector.broadcast %cst_8 : f32 to vector<8x1xf32>
    %9 = vector.extract_strided_slice %1 {offsets = [0, 0], sizes = [8, 31], strides = [1, 1]} : vector<8x32xf32> to vector<8x31xf32>
    %10 = tpu.concatenate %8, %9 in 1 : vector<8x1xf32>, vector<8x31xf32> -> vector<8x32xf32>
    %c8 = arith.constant 8 : index
    %c0_9 = arith.constant 0 : index
    %11 = vector.load %arg23[%c8, %c0_9] : memref<80x32xf32, #tpu.memory_space<vmem>>, vector<8x32xf32>
    tpu.vector_store %arg23[%c8, %c0_9], %10 {strides = array<i32>} : memref<80x32xf32, #tpu.memory_space<vmem>>, vector<8x32xf32>,
    %c16 = arith.constant 16 : index
    %c0_10 = arith.constant 0 : index
    %12 = vector.load %arg23[%c16, %c0_10] : memref<80x32xf32, #tpu.memory_space<vmem>>, vector<8x32xf32>
    tpu.vector_store %arg23[%c16, %c0_10], %1 {strides = array<i32>} : memref<80x32xf32, #tpu.memory_space<vmem>>, vector<8x32xf32>,
    %cst_11 = arith.constant 0.000000e+00 : f32
    %13 = vector.broadcast %cst_11 : f32 to vector<8x1xf32>
    %14 = vector.extract_strided_slice %1 {offsets = [0, 1], sizes = [8, 31], strides = [1, 1]} : vector<8x32xf32> to vector<8x31xf32>
    %15 = tpu.concatenate %14, %13 in 1 : vector<8x31xf32>, vector<8x1xf32> -> vector<8x32xf32>
    %c24 = arith.constant 24 : index
    %c0_12 = arith.constant 0 : index
    %16 = vector.load %arg23[%c24, %c0_12] : memref<80x32xf32, #tpu.memory_space<vmem>>, vector<8x32xf32>
    tpu.vector_store %arg23[%c24, %c0_12], %15 {strides = array<i32>} : memref<80x32xf32, #tpu.memory_space<vmem>>, vector<8x32xf32>,
    %cst_13 = arith.constant 0.000000e+00 : f32
    %17 = vector.broadcast %cst_13 : f32 to vector<8x2xf32>
    %18 = vector.extract_strided_slice %1 {offsets = [0, 2], sizes = [8, 30], strides = [1, 1]} : vector<8x32xf32> to vector<8x30xf32>
    %19 = tpu.concatenate %18, %17 in 1 : vector<8x30xf32>, vector<8x2xf32> -> vector<8x32xf32>
    %c32 = arith.constant 32 : index
    %c0_14 = arith.constant 0 : index
    %20 = vector.load %arg23[%c32, %c0_14] : memref<80x32xf32, #tpu.memory_space<vmem>>, vector<8x32xf32>
    tpu.vector_store %arg23[%c32, %c0_14], %19 {strides = array<i32>} : memref<80x32xf32, #tpu.memory_space<vmem>>, vector<8x32xf32>,
    %c0_15 = arith.constant 0 : index
    %c0_16 = arith.constant 0 : index
    %21 = vector.load %arg23[%c0_15, %c0_16] : memref<80x32xf32, #tpu.memory_space<vmem>>, vector<40x32xf32>
    %cst_17 = arith.constant dense<0.000000e+00> : vector<8x32xf32>
    %22 = tpu.matmul %2, %21, %cst_17 {dimension_numbers = #tpu.dot_dimension_numbers<[1], [0], [0], [1], [0, 0, 1, 1], [], []>} : vector<8x40xf32>, vector<40x32xf32>, vector<8x32xf32> -> vector<8x32xf32>
    %23 = vector.broadcast %3 : vector<8x1xf32> to vector<8x32xf32>
    %24 = arith.addf %22, %23 : vector<8x32xf32>
    %cst_18 = arith.constant 0.000000e+00 : f32
    %25 = vector.broadcast %cst_18 : f32 to vector<8x32xf32>
    %26 = arith.maximumf %24, %25 : vector<8x32xf32>
    %cst_19 = arith.constant 0.000000e+00 : f32
    %27 = vector.broadcast %cst_19 : f32 to vector<8x1xf32>
    %28 = vector.extract_strided_slice %26 {offsets = [0, 1], sizes = [8, 31], strides = [1, 1]} : vector<8x32xf32> to vector<8x31xf32>
    %29 = tpu.concatenate %28, %27 in 1 : vector<8x31xf32>, vector<8x1xf32> -> vector<8x32xf32>
    %30 = arith.maximumf %26, %29 : vector<8x32xf32>
    %c0_20 = arith.constant 0 : index
    %c0_21 = arith.constant 0 : index
    %31 = vector.load %arg4[%c0_20, %c0_21] : memref<16x40xf32, #tpu.memory_space<vmem>>, vector<16x40xf32>
    %c0_22 = arith.constant 0 : index
    %c0_23 = arith.constant 0 : index
    %32 = vector.load %arg5[%c0_22, %c0_23] : memref<16x1xf32, #tpu.memory_space<vmem>>, vector<16x1xf32>
    %cst_24 = arith.constant 0.000000e+00 : f32
    %33 = vector.broadcast %cst_24 : f32 to vector<8x4xf32>
    %34 = vector.extract_strided_slice %30 {offsets = [0, 0], sizes = [8, 28], strides = [1, 1]} : vector<8x32xf32> to vector<8x28xf32>
    %35 = tpu.concatenate %33, %34 in 1 : vector<8x4xf32>, vector<8x28xf32> -> vector<8x32xf32>
    %c0_25 = arith.constant 0 : index
    %c0_26 = arith.constant 0 : index
    %36 = vector.load %arg23[%c0_25, %c0_26] : memref<80x32xf32, #tpu.memory_space<vmem>>, vector<8x32xf32>
    tpu.vector_store %arg23[%c0_25, %c0_26], %35 {strides = array<i32>} : memref<80x32xf32, #tpu.memory_space<vmem>>, vector<8x32xf32>,
    %cst_27 = arith.constant 0.000000e+00 : f32
    %37 = vector.broadcast %cst_27 : f32 to vector<8x2xf32>
    %38 = vector.extract_strided_slice %30 {offsets = [0, 0], sizes = [8, 30], strides = [1, 1]} : vector<8x32xf32> to vector<8x30xf32>
    %39 = tpu.concatenate %37, %38 in 1 : vector<8x2xf32>, vector<8x30xf32> -> vector<8x32xf32>
    %c8_28 = arith.constant 8 : index
    %c0_29 = arith.constant 0 : index
    %40 = vector.load %arg23[%c8_28, %c0_29] : memref<80x32xf32, #tpu.memory_space<vmem>>, vector<8x32xf32>
    tpu.vector_store %arg23[%c8_28, %c0_29], %39 {strides = array<i32>} : memref<80x32xf32, #tpu.memory_space<vmem>>, vector<8x32xf32>,
    %c16_30 = arith.constant 16 : index
    %c0_31 = arith.constant 0 : index
    %41 = vector.load %arg23[%c16_30, %c0_31] : memref<80x32xf32, #tpu.memory_space<vmem>>, vector<8x32xf32>
    tpu.vector_store %arg23[%c16_30, %c0_31], %30 {strides = array<i32>} : memref<80x32xf32, #tpu.memory_space<vmem>>, vector<8x32xf32>,
    %cst_32 = arith.constant 0.000000e+00 : f32
    %42 = vector.broadcast %cst_32 : f32 to vector<8x2xf32>
    %43 = vector.extract_strided_slice %30 {offsets = [0, 2], sizes = [8, 30], strides = [1, 1]} : vector<8x32xf32> to vector<8x30xf32>
    %44 = tpu.concatenate %43, %42 in 1 : vector<8x30xf32>, vector<8x2xf32> -> vector<8x32xf32>
    %c24_33 = arith.constant 24 : index
    %c0_34 = arith.constant 0 : index
    %45 = vector.load %arg23[%c24_33, %c0_34] : memref<80x32xf32, #tpu.memory_space<vmem>>, vector<8x32xf32>
    tpu.vector_store %arg23[%c24_33, %c0_34], %44 {strides = array<i32>} : memref<80x32xf32, #tpu.memory_space<vmem>>, vector<8x32xf32>,
    %cst_35 = arith.constant 0.000000e+00 : f32
    %46 = vector.broadcast %cst_35 : f32 to vector<8x4xf32>
    %47 = vector.extract_strided_slice %30 {offsets = [0, 4], sizes = [8, 28], strides = [1, 1]} : vector<8x32xf32> to vector<8x28xf32>
    %48 = tpu.concatenate %47, %46 in 1 : vector<8x28xf32>, vector<8x4xf32> -> vector<8x32xf32>
    %c32_36 = arith.constant 32 : index
    %c0_37 = arith.constant 0 : index
    %49 = vector.load %arg23[%c32_36, %c0_37] : memref<80x32xf32, #tpu.memory_space<vmem>>, vector<8x32xf32>
    tpu.vector_store %arg23[%c32_36, %c0_37], %48 {strides = array<i32>} : memref<80x32xf32, #tpu.memory_space<vmem>>, vector<8x32xf32>,
    %c0_38 = arith.constant 0 : index
    %c0_39 = arith.constant 0 : index
    %50 = vector.load %arg23[%c0_38, %c0_39] : memref<80x32xf32, #tpu.memory_space<vmem>>, vector<40x32xf32>
    %cst_40 = arith.constant dense<0.000000e+00> : vector<16x32xf32>
    %51 = tpu.matmul %31, %50, %cst_40 {dimension_numbers = #tpu.dot_dimension_numbers<[1], [0], [0], [1], [0, 0, 1, 1], [], []>} : vector<16x40xf32>, vector<40x32xf32>, vector<16x32xf32> -> vector<16x32xf32>
    %52 = vector.broadcast %32 : vector<16x1xf32> to vector<16x32xf32>
    %53 = arith.addf %51, %52 : vector<16x32xf32>
    %cst_41 = arith.constant 0.000000e+00 : f32
    %54 = vector.broadcast %cst_41 : f32 to vector<16x32xf32>
    %55 = arith.maximumf %53, %54 : vector<16x32xf32>
    %cst_42 = arith.constant 0.000000e+00 : f32
    %56 = vector.broadcast %cst_42 : f32 to vector<16x2xf32>
    %57 = vector.extract_strided_slice %55 {offsets = [0, 2], sizes = [16, 30], strides = [1, 1]} : vector<16x32xf32> to vector<16x30xf32>
    %58 = tpu.concatenate %57, %56 in 1 : vector<16x30xf32>, vector<16x2xf32> -> vector<16x32xf32>
    %59 = arith.maximumf %55, %58 : vector<16x32xf32>
    %c0_43 = arith.constant 0 : index
    %c0_44 = arith.constant 0 : index
    %60 = vector.load %arg6[%c0_43, %c0_44] : memref<24x80xf32, #tpu.memory_space<vmem>>, vector<24x80xf32>
    %c0_45 = arith.constant 0 : index
    %c0_46 = arith.constant 0 : index
    %61 = vector.load %arg7[%c0_45, %c0_46] : memref<24x1xf32, #tpu.memory_space<vmem>>, vector<24x1xf32>
    %cst_47 = arith.constant 0.000000e+00 : f32
    %62 = vector.broadcast %cst_47 : f32 to vector<16x8xf32>
    %63 = vector.extract_strided_slice %59 {offsets = [0, 0], sizes = [16, 24], strides = [1, 1]} : vector<16x32xf32> to vector<16x24xf32>
    %64 = tpu.concatenate %62, %63 in 1 : vector<16x8xf32>, vector<16x24xf32> -> vector<16x32xf32>
    %c0_48 = arith.constant 0 : index
    %c0_49 = arith.constant 0 : index
    %65 = vector.load %arg23[%c0_48, %c0_49] : memref<80x32xf32, #tpu.memory_space<vmem>>, vector<16x32xf32>
    tpu.vector_store %arg23[%c0_48, %c0_49], %64 {strides = array<i32>} : memref<80x32xf32, #tpu.memory_space<vmem>>, vector<16x32xf32>,
    %cst_50 = arith.constant 0.000000e+00 : f32
    %66 = vector.broadcast %cst_50 : f32 to vector<16x4xf32>
    %67 = vector.extract_strided_slice %59 {offsets = [0, 0], sizes = [16, 28], strides = [1, 1]} : vector<16x32xf32> to vector<16x28xf32>
    %68 = tpu.concatenate %66, %67 in 1 : vector<16x4xf32>, vector<16x28xf32> -> vector<16x32xf32>
    %c16_51 = arith.constant 16 : index
    %c0_52 = arith.constant 0 : index
    %69 = vector.load %arg23[%c16_51, %c0_52] : memref<80x32xf32, #tpu.memory_space<vmem>>, vector<16x32xf32>
    tpu.vector_store %arg23[%c16_51, %c0_52], %68 {strides = array<i32>} : memref<80x32xf32, #tpu.memory_space<vmem>>, vector<16x32xf32>,
    %c32_53 = arith.constant 32 : index
    %c0_54 = arith.constant 0 : index
    %70 = vector.load %arg23[%c32_53, %c0_54] : memref<80x32xf32, #tpu.memory_space<vmem>>, vector<16x32xf32>
    tpu.vector_store %arg23[%c32_53, %c0_54], %59 {strides = array<i32>} : memref<80x32xf32, #tpu.memory_space<vmem>>, vector<16x32xf32>,
    %cst_55 = arith.constant 0.000000e+00 : f32
    %71 = vector.broadcast %cst_55 : f32 to vector<16x4xf32>
    %72 = vector.extract_strided_slice %59 {offsets = [0, 4], sizes = [16, 28], strides = [1, 1]} : vector<16x32xf32> to vector<16x28xf32>
    %73 = tpu.concatenate %72, %71 in 1 : vector<16x28xf32>, vector<16x4xf32> -> vector<16x32xf32>
    %c48 = arith.constant 48 : index
    %c0_56 = arith.constant 0 : index
    %74 = vector.load %arg23[%c48, %c0_56] : memref<80x32xf32, #tpu.memory_space<vmem>>, vector<16x32xf32>
    tpu.vector_store %arg23[%c48, %c0_56], %73 {strides = array<i32>} : memref<80x32xf32, #tpu.memory_space<vmem>>, vector<16x32xf32>,
    %cst_57 = arith.constant 0.000000e+00 : f32
    %75 = vector.broadcast %cst_57 : f32 to vector<16x8xf32>
    %76 = vector.extract_strided_slice %59 {offsets = [0, 8], sizes = [16, 24], strides = [1, 1]} : vector<16x32xf32> to vector<16x24xf32>
    %77 = tpu.concatenate %76, %75 in 1 : vector<16x24xf32>, vector<16x8xf32> -> vector<16x32xf32>
    %c64 = arith.constant 64 : index
    %c0_58 = arith.constant 0 : index
    %78 = vector.load %arg23[%c64, %c0_58] : memref<80x32xf32, #tpu.memory_space<vmem>>, vector<16x32xf32>
    tpu.vector_store %arg23[%c64, %c0_58], %77 {strides = array<i32>} : memref<80x32xf32, #tpu.memory_space<vmem>>, vector<16x32xf32>,
    %c0_59 = arith.constant 0 : index
    %c0_60 = arith.constant 0 : index
    %79 = vector.load %arg23[%c0_59, %c0_60] : memref<80x32xf32, #tpu.memory_space<vmem>>, vector<80x32xf32>
    %cst_61 = arith.constant dense<0.000000e+00> : vector<24x32xf32>
    %80 = tpu.matmul %60, %79, %cst_61 {dimension_numbers = #tpu.dot_dimension_numbers<[1], [0], [0], [1], [0, 0, 1, 1], [], []>} : vector<24x80xf32>, vector<80x32xf32>, vector<24x32xf32> -> vector<24x32xf32>
    %81 = vector.broadcast %61 : vector<24x1xf32> to vector<24x32xf32>
    %82 = arith.addf %80, %81 : vector<24x32xf32>
    %cst_62 = arith.constant 0.000000e+00 : f32
    %83 = vector.broadcast %cst_62 : f32 to vector<24x32xf32>
    %84 = arith.maximumf %82, %83 : vector<24x32xf32>
    %85 = tpu.iota {dimensions = array<i32: 1>} : vector<1x32xi32>
    %c0_63 = arith.constant 0 : index
    %c0_64 = arith.constant 0 : index
    %86 = vector.load %arg8[%c0_63, %c0_64] : memref<16x24xf32, #tpu.memory_space<vmem>>, vector<16x24xf32>
    %c0_65 = arith.constant 0 : index
    %c0_66 = arith.constant 0 : index
    %87 = vector.load %arg9[%c0_65, %c0_66] : memref<16x24xf32, #tpu.memory_space<vmem>>, vector<16x24xf32>
    %c0_67 = arith.constant 0 : index
    %c0_68 = arith.constant 0 : index
    %88 = vector.load %arg10[%c0_67, %c0_68] : memref<16x1xf32, #tpu.memory_space<vmem>>, vector<16x1xf32>
    %cst_69 = arith.constant dense<0.000000e+00> : vector<16x32xf32>
    %89 = tpu.matmul %86, %84, %cst_69 {dimension_numbers = #tpu.dot_dimension_numbers<[1], [0], [0], [1], [0, 0, 1, 1], [], []>} : vector<16x24xf32>, vector<24x32xf32>, vector<16x32xf32> -> vector<16x32xf32>
    %90 = vector.broadcast %88 : vector<16x1xf32> to vector<16x32xf32>
    %91 = arith.addf %89, %90 : vector<16x32xf32>
    %cst_70 = arith.constant dense<0.000000e+00> : vector<16x32xf32>
    %92 = tpu.matmul %87, %84, %cst_70 {dimension_numbers = #tpu.dot_dimension_numbers<[1], [0], [0], [1], [0, 0, 1, 1], [], []>} : vector<16x24xf32>, vector<24x32xf32>, vector<16x32xf32> -> vector<16x32xf32>
    %93 = vector.broadcast %88 : vector<16x1xf32> to vector<16x32xf32>
    %94 = arith.addf %92, %93 : vector<16x32xf32>
    %c3_i32 = arith.constant 3 : i32
    %95 = vector.broadcast %c3_i32 : i32 to vector<1x32xi32>
    %96 = arith.andi %85, %95 : vector<1x32xi32>
    %c0_i32 = arith.constant 0 : i32
    %97 = vector.broadcast %c0_i32 : i32 to vector<1x32xi32>
    %98 = arith.cmpi eq, %96, %97 : vector<1x32xi32>
    %99 = arith.extui %98 : vector<1x32xi1> to vector<1x32xi32>
    %100 = arith.sitofp %99 : vector<1x32xi32> to vector<1x32xf32>
    %101 = vector.broadcast %100 : vector<1x32xf32> to vector<16x32xf32>
    %102 = arith.mulf %101, %91 : vector<16x32xf32>
    %103 = vector.broadcast %100 : vector<1x32xf32> to vector<16x32xf32>
    %104 = arith.mulf %103, %94 : vector<16x32xf32>
    %cst_71 = arith.constant 0.000000e+00 : f32
    %105 = vector.broadcast %cst_71 : f32 to vector<16x2xf32>
    %106 = vector.extract_strided_slice %104 {offsets = [0, 0], sizes = [16, 30], strides = [1, 1]} : vector<16x32xf32> to vector<16x30xf32>
    %107 = tpu.concatenate %105, %106 in 1 : vector<16x2xf32>, vector<16x30xf32> -> vector<16x32xf32>
    %108 = arith.addf %102, %107 : vector<16x32xf32>
    %c0_72 = arith.constant 0 : index
    %c0_73 = arith.constant 0 : index
    %109 = vector.load %arg11[%c0_72, %c0_73] : memref<16x80xf32, #tpu.memory_space<vmem>>, vector<16x80xf32>
    %c0_74 = arith.constant 0 : index
    %c0_75 = arith.constant 0 : index
    %110 = vector.load %arg12[%c0_74, %c0_75] : memref<16x80xf32, #tpu.memory_space<vmem>>, vector<16x80xf32>
    %c0_76 = arith.constant 0 : index
    %c0_77 = arith.constant 0 : index
    %111 = vector.load %arg13[%c0_76, %c0_77] : memref<16x1xf32, #tpu.memory_space<vmem>>, vector<16x1xf32>
    %cst_78 = arith.constant 0.000000e+00 : f32
    %112 = vector.broadcast %cst_78 : f32 to vector<16x4xf32>
    %113 = vector.extract_strided_slice %108 {offsets = [0, 0], sizes = [16, 28], strides = [1, 1]} : vector<16x32xf32> to vector<16x28xf32>
    %114 = tpu.concatenate %112, %113 in 1 : vector<16x4xf32>, vector<16x28xf32> -> vector<16x32xf32>
    %c0_79 = arith.constant 0 : index
    %c0_80 = arith.constant 0 : index
    %115 = vector.load %arg23[%c0_79, %c0_80] : memref<80x32xf32, #tpu.memory_space<vmem>>, vector<16x32xf32>
    tpu.vector_store %arg23[%c0_79, %c0_80], %114 {strides = array<i32>} : memref<80x32xf32, #tpu.memory_space<vmem>>, vector<16x32xf32>,
    %cst_81 = arith.constant 0.000000e+00 : f32
    %116 = vector.broadcast %cst_81 : f32 to vector<16x2xf32>
    %117 = vector.extract_strided_slice %108 {offsets = [0, 0], sizes = [16, 30], strides = [1, 1]} : vector<16x32xf32> to vector<16x30xf32>
    %118 = tpu.concatenate %116, %117 in 1 : vector<16x2xf32>, vector<16x30xf32> -> vector<16x32xf32>
    %c16_82 = arith.constant 16 : index
    %c0_83 = arith.constant 0 : index
    %119 = vector.load %arg23[%c16_82, %c0_83] : memref<80x32xf32, #tpu.memory_space<vmem>>, vector<16x32xf32>
    tpu.vector_store %arg23[%c16_82, %c0_83], %118 {strides = array<i32>} : memref<80x32xf32, #tpu.memory_space<vmem>>, vector<16x32xf32>,
    %c32_84 = arith.constant 32 : index
    %c0_85 = arith.constant 0 : index
    %120 = vector.load %arg23[%c32_84, %c0_85] : memref<80x32xf32, #tpu.memory_space<vmem>>, vector<16x32xf32>
    tpu.vector_store %arg23[%c32_84, %c0_85], %108 {strides = array<i32>} : memref<80x32xf32, #tpu.memory_space<vmem>>, vector<16x32xf32>,
    %cst_86 = arith.constant 0.000000e+00 : f32
    %121 = vector.broadcast %cst_86 : f32 to vector<16x2xf32>
    %122 = vector.extract_strided_slice %108 {offsets = [0, 2], sizes = [16, 30], strides = [1, 1]} : vector<16x32xf32> to vector<16x30xf32>
    %123 = tpu.concatenate %122, %121 in 1 : vector<16x30xf32>, vector<16x2xf32> -> vector<16x32xf32>
    %c48_87 = arith.constant 48 : index
    %c0_88 = arith.constant 0 : index
    %124 = vector.load %arg23[%c48_87, %c0_88] : memref<80x32xf32, #tpu.memory_space<vmem>>, vector<16x32xf32>
    tpu.vector_store %arg23[%c48_87, %c0_88], %123 {strides = array<i32>} : memref<80x32xf32, #tpu.memory_space<vmem>>, vector<16x32xf32>,
    %cst_89 = arith.constant 0.000000e+00 : f32
    %125 = vector.broadcast %cst_89 : f32 to vector<16x4xf32>
    %126 = vector.extract_strided_slice %108 {offsets = [0, 4], sizes = [16, 28], strides = [1, 1]} : vector<16x32xf32> to vector<16x28xf32>
    %127 = tpu.concatenate %126, %125 in 1 : vector<16x28xf32>, vector<16x4xf32> -> vector<16x32xf32>
    %c64_90 = arith.constant 64 : index
    %c0_91 = arith.constant 0 : index
    %128 = vector.load %arg23[%c64_90, %c0_91] : memref<80x32xf32, #tpu.memory_space<vmem>>, vector<16x32xf32>
    tpu.vector_store %arg23[%c64_90, %c0_91], %127 {strides = array<i32>} : memref<80x32xf32, #tpu.memory_space<vmem>>, vector<16x32xf32>,
    %c0_92 = arith.constant 0 : index
    %c0_93 = arith.constant 0 : index
    %129 = vector.load %arg23[%c0_92, %c0_93] : memref<80x32xf32, #tpu.memory_space<vmem>>, vector<80x32xf32>
    %cst_94 = arith.constant dense<0.000000e+00> : vector<16x32xf32>
    %130 = tpu.matmul %109, %129, %cst_94 {dimension_numbers = #tpu.dot_dimension_numbers<[1], [0], [0], [1], [0, 0, 1, 1], [], []>} : vector<16x80xf32>, vector<80x32xf32>, vector<16x32xf32> -> vector<16x32xf32>
    %cst_95 = arith.constant 0.000000e+00 : f32
    %131 = vector.broadcast %cst_95 : f32 to vector<16x4xf32>
    %132 = vector.extract_strided_slice %55 {offsets = [0, 0], sizes = [16, 28], strides = [1, 1]} : vector<16x32xf32> to vector<16x28xf32>
    %133 = tpu.concatenate %131, %132 in 1 : vector<16x4xf32>, vector<16x28xf32> -> vector<16x32xf32>
    %c0_96 = arith.constant 0 : index
    %c0_97 = arith.constant 0 : index
    %134 = vector.load %arg23[%c0_96, %c0_97] : memref<80x32xf32, #tpu.memory_space<vmem>>, vector<16x32xf32>
    tpu.vector_store %arg23[%c0_96, %c0_97], %133 {strides = array<i32>} : memref<80x32xf32, #tpu.memory_space<vmem>>, vector<16x32xf32>,
    %cst_98 = arith.constant 0.000000e+00 : f32
    %135 = vector.broadcast %cst_98 : f32 to vector<16x2xf32>
    %136 = vector.extract_strided_slice %55 {offsets = [0, 0], sizes = [16, 30], strides = [1, 1]} : vector<16x32xf32> to vector<16x30xf32>
    %137 = tpu.concatenate %135, %136 in 1 : vector<16x2xf32>, vector<16x30xf32> -> vector<16x32xf32>
    %c16_99 = arith.constant 16 : index
    %c0_100 = arith.constant 0 : index
    %138 = vector.load %arg23[%c16_99, %c0_100] : memref<80x32xf32, #tpu.memory_space<vmem>>, vector<16x32xf32>
    tpu.vector_store %arg23[%c16_99, %c0_100], %137 {strides = array<i32>} : memref<80x32xf32, #tpu.memory_space<vmem>>, vector<16x32xf32>,
    %c32_101 = arith.constant 32 : index
    %c0_102 = arith.constant 0 : index
    %139 = vector.load %arg23[%c32_101, %c0_102] : memref<80x32xf32, #tpu.memory_space<vmem>>, vector<16x32xf32>
    tpu.vector_store %arg23[%c32_101, %c0_102], %55 {strides = array<i32>} : memref<80x32xf32, #tpu.memory_space<vmem>>, vector<16x32xf32>,
    %cst_103 = arith.constant 0.000000e+00 : f32
    %140 = vector.broadcast %cst_103 : f32 to vector<16x2xf32>
    %141 = vector.extract_strided_slice %55 {offsets = [0, 2], sizes = [16, 30], strides = [1, 1]} : vector<16x32xf32> to vector<16x30xf32>
    %142 = tpu.concatenate %141, %140 in 1 : vector<16x30xf32>, vector<16x2xf32> -> vector<16x32xf32>
    %c48_104 = arith.constant 48 : index
    %c0_105 = arith.constant 0 : index
    %143 = vector.load %arg23[%c48_104, %c0_105] : memref<80x32xf32, #tpu.memory_space<vmem>>, vector<16x32xf32>
    tpu.vector_store %arg23[%c48_104, %c0_105], %142 {strides = array<i32>} : memref<80x32xf32, #tpu.memory_space<vmem>>, vector<16x32xf32>,
    %cst_106 = arith.constant 0.000000e+00 : f32
    %144 = vector.broadcast %cst_106 : f32 to vector<16x4xf32>
    %145 = vector.extract_strided_slice %55 {offsets = [0, 4], sizes = [16, 28], strides = [1, 1]} : vector<16x32xf32> to vector<16x28xf32>
    %146 = tpu.concatenate %145, %144 in 1 : vector<16x28xf32>, vector<16x4xf32> -> vector<16x32xf32>
    %c64_107 = arith.constant 64 : index
    %c0_108 = arith.constant 0 : index
    %147 = vector.load %arg23[%c64_107, %c0_108] : memref<80x32xf32, #tpu.memory_space<vmem>>, vector<16x32xf32>
    tpu.vector_store %arg23[%c64_107, %c0_108], %146 {strides = array<i32>} : memref<80x32xf32, #tpu.memory_space<vmem>>, vector<16x32xf32>,
    %c0_109 = arith.constant 0 : index
    %c0_110 = arith.constant 0 : index
    %148 = vector.load %arg23[%c0_109, %c0_110] : memref<80x32xf32, #tpu.memory_space<vmem>>, vector<80x32xf32>
    %cst_111 = arith.constant dense<0.000000e+00> : vector<16x32xf32>
    %149 = tpu.matmul %110, %148, %cst_111 {dimension_numbers = #tpu.dot_dimension_numbers<[1], [0], [0], [1], [0, 0, 1, 1], [], []>} : vector<16x80xf32>, vector<80x32xf32>, vector<16x32xf32> -> vector<16x32xf32>
    %150 = arith.addf %130, %149 : vector<16x32xf32>
    %151 = vector.broadcast %111 : vector<16x1xf32> to vector<16x32xf32>
    %152 = arith.addf %150, %151 : vector<16x32xf32>
    %cst_112 = arith.constant 0.000000e+00 : f32
    %153 = vector.broadcast %cst_112 : f32 to vector<16x32xf32>
    %154 = arith.maximumf %152, %153 : vector<16x32xf32>
    %c0_113 = arith.constant 0 : index
    %c0_114 = arith.constant 0 : index
    %155 = vector.load %arg14[%c0_113, %c0_114] : memref<8x16xf32, #tpu.memory_space<vmem>>, vector<8x16xf32>
    %c0_115 = arith.constant 0 : index
    %c0_116 = arith.constant 0 : index
    %156 = vector.load %arg15[%c0_115, %c0_116] : memref<8x16xf32, #tpu.memory_space<vmem>>, vector<8x16xf32>
    %c0_117 = arith.constant 0 : index
    %c0_118 = arith.constant 0 : index
    %157 = vector.load %arg16[%c0_117, %c0_118] : memref<8x1xf32, #tpu.memory_space<vmem>>, vector<8x1xf32>
    %cst_119 = arith.constant dense<0.000000e+00> : vector<8x32xf32>
    %158 = tpu.matmul %155, %154, %cst_119 {dimension_numbers = #tpu.dot_dimension_numbers<[1], [0], [0], [1], [0, 0, 1, 1], [], []>} : vector<8x16xf32>, vector<16x32xf32>, vector<8x32xf32> -> vector<8x32xf32>
    %159 = vector.broadcast %157 : vector<8x1xf32> to vector<8x32xf32>
    %160 = arith.addf %158, %159 : vector<8x32xf32>
    %cst_120 = arith.constant dense<0.000000e+00> : vector<8x32xf32>
    %161 = tpu.matmul %156, %154, %cst_120 {dimension_numbers = #tpu.dot_dimension_numbers<[1], [0], [0], [1], [0, 0, 1, 1], [], []>} : vector<8x16xf32>, vector<16x32xf32>, vector<8x32xf32> -> vector<8x32xf32>
    %162 = vector.broadcast %157 : vector<8x1xf32> to vector<8x32xf32>
    %163 = arith.addf %161, %162 : vector<8x32xf32>
    %c1_i32 = arith.constant 1 : i32
    %164 = vector.broadcast %c1_i32 : i32 to vector<1x32xi32>
    %165 = arith.andi %85, %164 : vector<1x32xi32>
    %c0_i32_121 = arith.constant 0 : i32
    %166 = vector.broadcast %c0_i32_121 : i32 to vector<1x32xi32>
    %167 = arith.cmpi eq, %165, %166 : vector<1x32xi32>
    %168 = arith.extui %167 : vector<1x32xi1> to vector<1x32xi32>
    %169 = arith.sitofp %168 : vector<1x32xi32> to vector<1x32xf32>
    %170 = vector.broadcast %169 : vector<1x32xf32> to vector<8x32xf32>
    %171 = arith.mulf %170, %160 : vector<8x32xf32>
    %172 = vector.broadcast %169 : vector<1x32xf32> to vector<8x32xf32>
    %173 = arith.mulf %172, %163 : vector<8x32xf32>
    %cst_122 = arith.constant 0.000000e+00 : f32
    %174 = vector.broadcast %cst_122 : f32 to vector<8x1xf32>
    %175 = vector.extract_strided_slice %173 {offsets = [0, 0], sizes = [8, 31], strides = [1, 1]} : vector<8x32xf32> to vector<8x31xf32>
    %176 = tpu.concatenate %174, %175 in 1 : vector<8x1xf32>, vector<8x31xf32> -> vector<8x32xf32>
    %177 = arith.addf %171, %176 : vector<8x32xf32>
    %c0_123 = arith.constant 0 : index
    %c0_124 = arith.constant 0 : index
    %178 = vector.load %arg17[%c0_123, %c0_124] : memref<8x40xf32, #tpu.memory_space<vmem>>, vector<8x40xf32>
    %c0_125 = arith.constant 0 : index
    %c0_126 = arith.constant 0 : index
    %179 = vector.load %arg18[%c0_125, %c0_126] : memref<8x40xf32, #tpu.memory_space<vmem>>, vector<8x40xf32>
    %c0_127 = arith.constant 0 : index
    %c0_128 = arith.constant 0 : index
    %180 = vector.load %arg19[%c0_127, %c0_128] : memref<8x1xf32, #tpu.memory_space<vmem>>, vector<8x1xf32>
    %cst_129 = arith.constant 0.000000e+00 : f32
    %181 = vector.broadcast %cst_129 : f32 to vector<8x2xf32>
    %182 = vector.extract_strided_slice %177 {offsets = [0, 0], sizes = [8, 30], strides = [1, 1]} : vector<8x32xf32> to vector<8x30xf32>
    %183 = tpu.concatenate %181, %182 in 1 : vector<8x2xf32>, vector<8x30xf32> -> vector<8x32xf32>
    %c0_130 = arith.constant 0 : index
    %c0_131 = arith.constant 0 : index
    %184 = vector.load %arg23[%c0_130, %c0_131] : memref<80x32xf32, #tpu.memory_space<vmem>>, vector<8x32xf32>
    tpu.vector_store %arg23[%c0_130, %c0_131], %183 {strides = array<i32>} : memref<80x32xf32, #tpu.memory_space<vmem>>, vector<8x32xf32>,
    %cst_132 = arith.constant 0.000000e+00 : f32
    %185 = vector.broadcast %cst_132 : f32 to vector<8x1xf32>
    %186 = vector.extract_strided_slice %177 {offsets = [0, 0], sizes = [8, 31], strides = [1, 1]} : vector<8x32xf32> to vector<8x31xf32>
    %187 = tpu.concatenate %185, %186 in 1 : vector<8x1xf32>, vector<8x31xf32> -> vector<8x32xf32>
    %c8_133 = arith.constant 8 : index
    %c0_134 = arith.constant 0 : index
    %188 = vector.load %arg23[%c8_133, %c0_134] : memref<80x32xf32, #tpu.memory_space<vmem>>, vector<8x32xf32>
    tpu.vector_store %arg23[%c8_133, %c0_134], %187 {strides = array<i32>} : memref<80x32xf32, #tpu.memory_space<vmem>>, vector<8x32xf32>,
    %c16_135 = arith.constant 16 : index
    %c0_136 = arith.constant 0 : index
    %189 = vector.load %arg23[%c16_135, %c0_136] : memref<80x32xf32, #tpu.memory_space<vmem>>, vector<8x32xf32>
    tpu.vector_store %arg23[%c16_135, %c0_136], %177 {strides = array<i32>} : memref<80x32xf32, #tpu.memory_space<vmem>>, vector<8x32xf32>,
    %cst_137 = arith.constant 0.000000e+00 : f32
    %190 = vector.broadcast %cst_137 : f32 to vector<8x1xf32>
    %191 = vector.extract_strided_slice %177 {offsets = [0, 1], sizes = [8, 31], strides = [1, 1]} : vector<8x32xf32> to vector<8x31xf32>
    %192 = tpu.concatenate %191, %190 in 1 : vector<8x31xf32>, vector<8x1xf32> -> vector<8x32xf32>
    %c24_138 = arith.constant 24 : index
    %c0_139 = arith.constant 0 : index
    %193 = vector.load %arg23[%c24_138, %c0_139] : memref<80x32xf32, #tpu.memory_space<vmem>>, vector<8x32xf32>
    tpu.vector_store %arg23[%c24_138, %c0_139], %192 {strides = array<i32>} : memref<80x32xf32, #tpu.memory_space<vmem>>, vector<8x32xf32>,
    %cst_140 = arith.constant 0.000000e+00 : f32
    %194 = vector.broadcast %cst_140 : f32 to vector<8x2xf32>
    %195 = vector.extract_strided_slice %177 {offsets = [0, 2], sizes = [8, 30], strides = [1, 1]} : vector<8x32xf32> to vector<8x30xf32>
    %196 = tpu.concatenate %195, %194 in 1 : vector<8x30xf32>, vector<8x2xf32> -> vector<8x32xf32>
    %c32_141 = arith.constant 32 : index
    %c0_142 = arith.constant 0 : index
    %197 = vector.load %arg23[%c32_141, %c0_142] : memref<80x32xf32, #tpu.memory_space<vmem>>, vector<8x32xf32>
    tpu.vector_store %arg23[%c32_141, %c0_142], %196 {strides = array<i32>} : memref<80x32xf32, #tpu.memory_space<vmem>>, vector<8x32xf32>,
    %c0_143 = arith.constant 0 : index
    %c0_144 = arith.constant 0 : index
    %198 = vector.load %arg23[%c0_143, %c0_144] : memref<80x32xf32, #tpu.memory_space<vmem>>, vector<40x32xf32>
    %cst_145 = arith.constant dense<0.000000e+00> : vector<8x32xf32>
    %199 = tpu.matmul %178, %198, %cst_145 {dimension_numbers = #tpu.dot_dimension_numbers<[1], [0], [0], [1], [0, 0, 1, 1], [], []>} : vector<8x40xf32>, vector<40x32xf32>, vector<8x32xf32> -> vector<8x32xf32>
    %cst_146 = arith.constant 0.000000e+00 : f32
    %200 = vector.broadcast %cst_146 : f32 to vector<8x2xf32>
    %201 = vector.extract_strided_slice %26 {offsets = [0, 0], sizes = [8, 30], strides = [1, 1]} : vector<8x32xf32> to vector<8x30xf32>
    %202 = tpu.concatenate %200, %201 in 1 : vector<8x2xf32>, vector<8x30xf32> -> vector<8x32xf32>
    %c0_147 = arith.constant 0 : index
    %c0_148 = arith.constant 0 : index
    %203 = vector.load %arg23[%c0_147, %c0_148] : memref<80x32xf32, #tpu.memory_space<vmem>>, vector<8x32xf32>
    tpu.vector_store %arg23[%c0_147, %c0_148], %202 {strides = array<i32>} : memref<80x32xf32, #tpu.memory_space<vmem>>, vector<8x32xf32>,
    %cst_149 = arith.constant 0.000000e+00 : f32
    %204 = vector.broadcast %cst_149 : f32 to vector<8x1xf32>
    %205 = vector.extract_strided_slice %26 {offsets = [0, 0], sizes = [8, 31], strides = [1, 1]} : vector<8x32xf32> to vector<8x31xf32>
    %206 = tpu.concatenate %204, %205 in 1 : vector<8x1xf32>, vector<8x31xf32> -> vector<8x32xf32>
    %c8_150 = arith.constant 8 : index
    %c0_151 = arith.constant 0 : index
    %207 = vector.load %arg23[%c8_150, %c0_151] : memref<80x32xf32, #tpu.memory_space<vmem>>, vector<8x32xf32>
    tpu.vector_store %arg23[%c8_150, %c0_151], %206 {strides = array<i32>} : memref<80x32xf32, #tpu.memory_space<vmem>>, vector<8x32xf32>,
    %c16_152 = arith.constant 16 : index
    %c0_153 = arith.constant 0 : index
    %208 = vector.load %arg23[%c16_152, %c0_153] : memref<80x32xf32, #tpu.memory_space<vmem>>, vector<8x32xf32>
    tpu.vector_store %arg23[%c16_152, %c0_153], %26 {strides = array<i32>} : memref<80x32xf32, #tpu.memory_space<vmem>>, vector<8x32xf32>,
    %cst_154 = arith.constant 0.000000e+00 : f32
    %209 = vector.broadcast %cst_154 : f32 to vector<8x1xf32>
    %210 = vector.extract_strided_slice %26 {offsets = [0, 1], sizes = [8, 31], strides = [1, 1]} : vector<8x32xf32> to vector<8x31xf32>
    %211 = tpu.concatenate %210, %209 in 1 : vector<8x31xf32>, vector<8x1xf32> -> vector<8x32xf32>
    %c24_155 = arith.constant 24 : index
    %c0_156 = arith.constant 0 : index
    %212 = vector.load %arg23[%c24_155, %c0_156] : memref<80x32xf32, #tpu.memory_space<vmem>>, vector<8x32xf32>
    tpu.vector_store %arg23[%c24_155, %c0_156], %211 {strides = array<i32>} : memref<80x32xf32, #tpu.memory_space<vmem>>, vector<8x32xf32>,
    %cst_157 = arith.constant 0.000000e+00 : f32
    %213 = vector.broadcast %cst_157 : f32 to vector<8x2xf32>
    %214 = vector.extract_strided_slice %26 {offsets = [0, 2], sizes = [8, 30], strides = [1, 1]} : vector<8x32xf32> to vector<8x30xf32>
    %215 = tpu.concatenate %214, %213 in 1 : vector<8x30xf32>, vector<8x2xf32> -> vector<8x32xf32>
    %c32_158 = arith.constant 32 : index
    %c0_159 = arith.constant 0 : index
    %216 = vector.load %arg23[%c32_158, %c0_159] : memref<80x32xf32, #tpu.memory_space<vmem>>, vector<8x32xf32>
    tpu.vector_store %arg23[%c32_158, %c0_159], %215 {strides = array<i32>} : memref<80x32xf32, #tpu.memory_space<vmem>>, vector<8x32xf32>,
    %c0_160 = arith.constant 0 : index
    %c0_161 = arith.constant 0 : index
    %217 = vector.load %arg23[%c0_160, %c0_161] : memref<80x32xf32, #tpu.memory_space<vmem>>, vector<40x32xf32>
    %cst_162 = arith.constant dense<0.000000e+00> : vector<8x32xf32>
    %218 = tpu.matmul %179, %217, %cst_162 {dimension_numbers = #tpu.dot_dimension_numbers<[1], [0], [0], [1], [0, 0, 1, 1], [], []>} : vector<8x40xf32>, vector<40x32xf32>, vector<8x32xf32> -> vector<8x32xf32>
    %219 = arith.addf %199, %218 : vector<8x32xf32>
    %220 = vector.broadcast %180 : vector<8x1xf32> to vector<8x32xf32>
    %221 = arith.addf %219, %220 : vector<8x32xf32>
    %cst_163 = arith.constant 0.000000e+00 : f32
    %222 = vector.broadcast %cst_163 : f32 to vector<8x32xf32>
    %223 = arith.maximumf %221, %222 : vector<8x32xf32>
    %c0_164 = arith.constant 0 : index
    %c0_165 = arith.constant 0 : index
    %224 = vector.load %arg20[%c0_164, %c0_165] : memref<1x8xf32, #tpu.memory_space<vmem>>, vector<1x8xf32>
    %c0_166 = arith.constant 0 : index
    %c0_167 = arith.constant 0 : index
    %225 = vector.load %arg21[%c0_166, %c0_167] : memref<1x1xf32, #tpu.memory_space<vmem>>, vector<1x1xf32>
    %cst_168 = arith.constant dense<0.000000e+00> : vector<1x32xf32>
    %226 = tpu.matmul %224, %223, %cst_168 {dimension_numbers = #tpu.dot_dimension_numbers<[1], [0], [0], [1], [0, 0, 1, 1], [], []>} : vector<1x8xf32>, vector<8x32xf32>, vector<1x32xf32> -> vector<1x32xf32>
    %227 = vector.broadcast %225 : vector<1x1xf32> to vector<1x32xf32>
    %228 = arith.addf %226, %227 : vector<1x32xf32>
    %c0_169 = arith.constant 0 : index
    %c0_170 = arith.constant 0 : index
    %c0_171 = arith.constant 0 : index
    %229 = vector.load %arg22[%c0_169, %c0_170, %c0_171] : memref<1x1x32xf32, #tpu.memory_space<vmem>>, vector<1x1x32xf32>
    %230 = vector.shape_cast %229 : vector<1x1x32xf32> to vector<1x32xf32>
    %231 = vector.shape_cast %228 : vector<1x32xf32> to vector<1x1x32xf32>
    tpu.vector_store %arg22[%c0_169, %c0_170, %c0_171], %231 {strides = array<i32>} : memref<1x1x32xf32, #tpu.memory_space<vmem>>, vector<1x1x32xf32>,
    return
  }
  func.func @transform_0(%arg0: i32) -> (i32, i32, i32) {
    %c0_i32 = arith.constant 0 : i32
    %c0_i32_0 = arith.constant 0 : i32
    %c0_i32_1 = arith.constant 0 : i32
    return %arg0, %c0_i32, %c0_i32_0 : i32, i32, i32
  }
  func.func @transform_1(%arg0: i32) -> (i32, i32) {
    %c0_i32 = arith.constant 0 : i32
    %c0_i32_0 = arith.constant 0 : i32
    %c0_i32_1 = arith.constant 0 : i32
    return %c0_i32, %c0_i32_0 : i32, i32
  }
  func.func @transform_2(%arg0: i32) -> (i32, i32) {
    %c0_i32 = arith.constant 0 : i32
    %c0_i32_0 = arith.constant 0 : i32
    %c0_i32_1 = arith.constant 0 : i32
    return %c0_i32, %c0_i32_0 : i32, i32
  }
  func.func @transform_3(%arg0: i32) -> (i32, i32) {
    %c0_i32 = arith.constant 0 : i32
    %c0_i32_0 = arith.constant 0 : i32
    %c0_i32_1 = arith.constant 0 : i32
    return %c0_i32, %c0_i32_0 : i32, i32
  }
  func.func @transform_4(%arg0: i32) -> (i32, i32) {
    %c0_i32 = arith.constant 0 : i32
    %c0_i32_0 = arith.constant 0 : i32
    %c0_i32_1 = arith.constant 0 : i32
    return %c0_i32, %c0_i32_0 : i32, i32
  }
  func.func @transform_5(%arg0: i32) -> (i32, i32) {
    %c0_i32 = arith.constant 0 : i32
    %c0_i32_0 = arith.constant 0 : i32
    %c0_i32_1 = arith.constant 0 : i32
    return %c0_i32, %c0_i32_0 : i32, i32
  }
  func.func @transform_6(%arg0: i32) -> (i32, i32) {
    %c0_i32 = arith.constant 0 : i32
    %c0_i32_0 = arith.constant 0 : i32
    %c0_i32_1 = arith.constant 0 : i32
    return %c0_i32, %c0_i32_0 : i32, i32
  }
  func.func @transform_7(%arg0: i32) -> (i32, i32) {
    %c0_i32 = arith.constant 0 : i32
    %c0_i32_0 = arith.constant 0 : i32
    %c0_i32_1 = arith.constant 0 : i32
    return %c0_i32, %c0_i32_0 : i32, i32
  }
  func.func @transform_8(%arg0: i32) -> (i32, i32) {
    %c0_i32 = arith.constant 0 : i32
    %c0_i32_0 = arith.constant 0 : i32
    %c0_i32_1 = arith.constant 0 : i32
    return %c0_i32, %c0_i32_0 : i32, i32
  }
  func.func @transform_9(%arg0: i32) -> (i32, i32) {
    %c0_i32 = arith.constant 0 : i32
    %c0_i32_0 = arith.constant 0 : i32
    %c0_i32_1 = arith.constant 0 : i32
    return %c0_i32, %c0_i32_0 : i32, i32
  }
  func.func @transform_10(%arg0: i32) -> (i32, i32) {
    %c0_i32 = arith.constant 0 : i32
    %c0_i32_0 = arith.constant 0 : i32
    %c0_i32_1 = arith.constant 0 : i32
    return %c0_i32, %c0_i32_0 : i32, i32
  }
  func.func @transform_11(%arg0: i32) -> (i32, i32) {
    %c0_i32 = arith.constant 0 : i32
    %c0_i32_0 = arith.constant 0 : i32
    %c0_i32_1 = arith.constant 0 : i32
    return %c0_i32, %c0_i32_0 : i32, i32
  }
  func.func @transform_12(%arg0: i32) -> (i32, i32) {
    %c0_i32 = arith.constant 0 : i32
    %c0_i32_0 = arith.constant 0 : i32
    %c0_i32_1 = arith.constant 0 : i32
    return %c0_i32, %c0_i32_0 : i32, i32
  }
  func.func @transform_13(%arg0: i32) -> (i32, i32) {
    %c0_i32 = arith.constant 0 : i32
    %c0_i32_0 = arith.constant 0 : i32
    %c0_i32_1 = arith.constant 0 : i32
    return %c0_i32, %c0_i32_0 : i32, i32
  }
  func.func @transform_14(%arg0: i32) -> (i32, i32) {
    %c0_i32 = arith.constant 0 : i32
    %c0_i32_0 = arith.constant 0 : i32
    %c0_i32_1 = arith.constant 0 : i32
    return %c0_i32, %c0_i32_0 : i32, i32
  }
  func.func @transform_15(%arg0: i32) -> (i32, i32) {
    %c0_i32 = arith.constant 0 : i32
    %c0_i32_0 = arith.constant 0 : i32
    %c0_i32_1 = arith.constant 0 : i32
    return %c0_i32, %c0_i32_0 : i32, i32
  }
  func.func @transform_16(%arg0: i32) -> (i32, i32) {
    %c0_i32 = arith.constant 0 : i32
    %c0_i32_0 = arith.constant 0 : i32
    %c0_i32_1 = arith.constant 0 : i32
    return %c0_i32, %c0_i32_0 : i32, i32
  }
  func.func @transform_17(%arg0: i32) -> (i32, i32) {
    %c0_i32 = arith.constant 0 : i32
    %c0_i32_0 = arith.constant 0 : i32
    %c0_i32_1 = arith.constant 0 : i32
    return %c0_i32, %c0_i32_0 : i32, i32
  }
  func.func @transform_18(%arg0: i32) -> (i32, i32) {
    %c0_i32 = arith.constant 0 : i32
    %c0_i32_0 = arith.constant 0 : i32
    %c0_i32_1 = arith.constant 0 : i32
    return %c0_i32, %c0_i32_0 : i32, i32
  }
  func.func @transform_19(%arg0: i32) -> (i32, i32) {
    %c0_i32 = arith.constant 0 : i32
    %c0_i32_0 = arith.constant 0 : i32
    %c0_i32_1 = arith.constant 0 : i32
    return %c0_i32, %c0_i32_0 : i32, i32
  }
  func.func @transform_20(%arg0: i32) -> (i32, i32) {
    %c0_i32 = arith.constant 0 : i32
    %c0_i32_0 = arith.constant 0 : i32
    %c0_i32_1 = arith.constant 0 : i32
    return %c0_i32, %c0_i32_0 : i32, i32
  }
  func.func @transform_21(%arg0: i32) -> (i32, i32, i32) {
    %c0_i32 = arith.constant 0 : i32
    %c0_i32_0 = arith.constant 0 : i32
    %c0_i32_1 = arith.constant 0 : i32
    return %arg0, %c0_i32, %c0_i32_0 : i32, i32, i32
  }
}

</mosaic_0001>

<llo_original>
// kernel: _lambda_.1
$region0: #{_lambda_.1}
  #allocation0 [shape = 'u32[]', space=smem, size = 0x4, offset = 0x4, fixed_abs, tag = 'smem constant byte address 0x4 - core index']
  #allocation1 [shape = 'u32[144,128]{1,0:T(1,128)}', space=vmem, size = 0x12000, scoped, tag = 'internal scratch']
  #allocation2 [shape = 'f32[80,32]{1,0:T(8,128)}', space=vmem, size = 0xa000, scoped, tag = 'scratch operand']
  #allocation3 [shape = 'f32[1,1]{1,0:T(1,128)S(1)}', space=vmem, size = 0x200, scoped, tag = 'scoped memory for _lambda_.1']
  %s0 = inlined_call_operand.vmem [shape: f32[2,8,32], index: 0, kind: input, shape index: {}]
  %s1 = inlined_call_operand.vmem [shape: f32[8,40], index: 1, kind: input, shape index: {}]
  %s2 = inlined_call_operand.vmem [shape: f32[8,1], index: 2, kind: input, shape index: {}]
  %s3 = inlined_call_operand.vmem [shape: f32[16,40], index: 3, kind: input, shape index: {}]
  %s4 = inlined_call_operand.vmem [shape: f32[16,1], index: 4, kind: input, shape index: {}]
  %s5 = inlined_call_operand.vmem [shape: f32[24,80], index: 5, kind: input, shape index: {}]
  %s6 = inlined_call_operand.vmem [shape: f32[24,1], index: 6, kind: input, shape index: {}]
  %s7 = inlined_call_operand.vmem [shape: f32[16,24], index: 7, kind: input, shape index: {}]
  %s8 = inlined_call_operand.vmem [shape: f32[16,24], index: 8, kind: input, shape index: {}]
  %s9 = inlined_call_operand.vmem [shape: f32[16,1], index: 9, kind: input, shape index: {}]
  %s10 = inlined_call_operand.vmem [shape: f32[16,80], index: 10, kind: input, shape index: {}]
  %s11 = inlined_call_operand.vmem [shape: f32[16,80], index: 11, kind: input, shape index: {}]
  %s12 = inlined_call_operand.vmem [shape: f32[16,1], index: 12, kind: input, shape index: {}]
  %s13 = inlined_call_operand.vmem [shape: f32[8,16], index: 13, kind: input, shape index: {}]
  %s14 = inlined_call_operand.vmem [shape: f32[8,16], index: 14, kind: input, shape index: {}]
  %s15 = inlined_call_operand.vmem [shape: f32[8,1], index: 15, kind: input, shape index: {}]
  %s16 = inlined_call_operand.vmem [shape: f32[8,40], index: 16, kind: input, shape index: {}]
  %s17 = inlined_call_operand.vmem [shape: f32[8,40], index: 17, kind: input, shape index: {}]
  %s18 = inlined_call_operand.vmem [shape: f32[8,1], index: 18, kind: input, shape index: {}]
  %s19 = inlined_call_operand.vmem [shape: f32[1,8], index: 19, kind: input, shape index: {}]
  %s20 = inlined_call_operand.<no memory space> [shape: f32[1,1], index: 20, kind: input, shape index: {}]
  %s21 = inlined_call_operand.hbm [shape: f32[2,1,32], index: 21, kind: output, shape index: {}]
  %s22 = sld [smem:[#allocation0]]
  $region117: #{_lambda_.1} parent=0
    _
  %s24 = ssub.s32 1, %s22
  %s25 = scalar_select 0, %s24, %s22
  %v26 = vstv %s20
  %27 = vst [vmem:[#allocation3] sm:$0x1] %v26
  $region1: #{_lambda_.1} parent=0
    #allocation4 [shape = 'u8[1024]{0}', space=vmem, size = 0x400, scoped, tag = 'output window, operand 0']
    #allocation5 [shape = 's32[2]{0}', space=sflag, size = 0x8, scoped, tag = 'scoped memory for _lambda_.1']
    %28 = vsyncpa [#allocation5], 0
    %s29 = scalar_lea.sflag [#allocation5], 1
    %30 = vsyncpa %s29, 0
    loop: start=0, step=1, limit=4
    $region2: #{_lambda_.1} parent=1 // loop_pre_header
      _
    $region3: #{_lambda_.1} parent=1 // loop_header
      %s32 = sphi 0, %s36
      %p33 = scmp.ge.s32.totalorder %s32, 4
      %s42 = sphi 0, %s44
      %s45 = sphi 0, %s42
      %s46 = sphi 0, %s45
      %s62 = sphi 0, %s46
      %s66 = sphi 0, %s66
      %s68 = sphi 0, %s66
      %s69 = sphi 0, %s68
      %s83 = sphi 0, %s69
      %s87 = sphi 0, %s87
      %s89 = sphi 0, %s87
      %s90 = sphi 0, %s89
      %s104 = sphi 0, %s90
      %s108 = sphi 0, %s108
      %s110 = sphi 0, %s108
      %s111 = sphi 0, %s110
      %s125 = sphi 0, %s111
      %s129 = sphi 0, %s129
      %s131 = sphi 0, %s129
      %s132 = sphi 0, %s131
      %s146 = sphi 0, %s132
      %s150 = sphi 0, %s150
      %s152 = sphi 0, %s150
      %s153 = sphi 0, %s152
      %s167 = sphi 0, %s153
      %s171 = sphi 0, %s171
      %s173 = sphi 0, %s171
      %s174 = sphi 0, %s173
      %s188 = sphi 0, %s174
      %s192 = sphi 0, %s192
      %s194 = sphi 0, %s192
      %s195 = sphi 0, %s194
      %s209 = sphi 0, %s195
      %s213 = sphi 0, %s213
      %s215 = sphi 0, %s213
      %s216 = sphi 0, %s215
      %s230 = sphi 0, %s216
      %s234 = sphi 0, %s234
      %s236 = sphi 0, %s234
      %s237 = sphi 0, %s236
      %s251 = sphi 0, %s237
      %s255 = sphi 0, %s255
      %s257 = sphi 0, %s255
      %s258 = sphi 0, %s257
      %s272 = sphi 0, %s258
      %s276 = sphi 0, %s276
      %s278 = sphi 0, %s276
      %s279 = sphi 0, %s278
      %s293 = sphi 0, %s279
      %s297 = sphi 0, %s297
      %s299 = sphi 0, %s297
      %s300 = sphi 0, %s299
      %s314 = sphi 0, %s300
      %s318 = sphi 0, %s318
      %s320 = sphi 0, %s318
      %s321 = sphi 0, %s320
      %s335 = sphi 0, %s321
      %s339 = sphi 0, %s339
      %s341 = sphi 0, %s339
      %s342 = sphi 0, %s341
      %s356 = sphi 0, %s342
      %s360 = sphi 0, %s360
      %s362 = sphi 0, %s360
      %s363 = sphi 0, %s362
      %s377 = sphi 0, %s363
      %s381 = sphi 0, %s381
      %s383 = sphi 0, %s381
      %s384 = sphi 0, %s383
      %s398 = sphi 0, %s384
      %s402 = sphi 0, %s402
      %s404 = sphi 0, %s402
      %s405 = sphi 0, %s404
      %s419 = sphi 0, %s405
      %s423 = sphi 0, %s423
      %s425 = sphi 0, %s423
      %s426 = sphi 0, %s425
      %s440 = sphi 0, %s426
      %s444 = sphi 0, %s444
      %s446 = sphi 0, %s444
      %s447 = sphi 0, %s446
      %s461 = sphi 0, %s447
      %s465 = sphi 0, %s465
      %s467 = sphi 0, %s465
      %s468 = sphi 0, %s467
      %s482 = sphi 0, %s468
      %s488 = sphi 0, %s490
      %s491 = sphi 0, %s488
      %s492 = sphi 0, %s491
      %s508 = sphi 0, %s492
    $region4: #{_lambda_.1} parent=1 // loop_header_branch
      %35 = sbr.rel (%p33) target = $region8
    $region5: #{_lambda_.1} parent=1 // loop_body
      %s37 = ssub.s32 %s32, 1
      %s38 = ssub.s32 %s32, 2
      %s39 = sadd.s32 %s32, 1
      %s40 = ssub.s32 %s32, %s39
      %p41 = scmp.eq.s32.totalorder %s40, 0
      %s43 = sadd.s32 %s42, 1
      %s44 = scalar_select %p41, %s42, %s43
      %p47 = pneg %p41
      %p48 = scmp.eq.s32.totalorder %s32, 1
      %p49 = por %p47, %p48
      %p50 = scmp.ne.s32.totalorder %s42, %s45
      %p51 = scmp.eq.s32.totalorder %s32, 0
      %p52 = por %p50, %p51
      %p53 = scmp.ne.s32.totalorder %s42, %s45
      %p54 = scmp.eq.s32.totalorder %s37, 1
      %p55 = por %p53, %p54
      %p56 = scmp.ne.s32.totalorder %s45, %s46
      %p57 = scmp.eq.s32.totalorder %s37, 0
      %p58 = por %p56, %p57
      %p59 = scmp.ne.s32.totalorder %s45, %s46
      %p60 = scmp.eq.s32.totalorder %s38, 1
      %p61 = por %p59, %p60
      %p63 = scmp.ne.s32.totalorder %s46, %s62
      %p64 = scmp.eq.s32.totalorder %s38, 0
      %p65 = por %p63, %p64
      %s67 = sadd.s32 %s66, 1
      %p70 = scmp.eq.s32.totalorder %s32, 1
      %p71 = scmp.ne.s32.totalorder %s66, %s68
      %p72 = scmp.eq.s32.totalorder %s32, 0
      %p73 = por %p71, %p72
      %p74 = scmp.ne.s32.totalorder %s66, %s68
      %p75 = scmp.eq.s32.totalorder %s37, 1
      %p76 = por %p74, %p75
      %p77 = scmp.ne.s32.totalorder %s68, %s69
      %p78 = scmp.eq.s32.totalorder %s37, 0
      %p79 = por %p77, %p78
      %p80 = scmp.ne.s32.totalorder %s68, %s69
      %p81 = scmp.eq.s32.totalorder %s38, 1
      %p82 = por %p80, %p81
      %p84 = scmp.ne.s32.totalorder %s69, %s83
      %p85 = scmp.eq.s32.totalorder %s38, 0
      %p86 = por %p84, %p85
      %s88 = sadd.s32 %s87, 1
      %p91 = scmp.eq.s32.totalorder %s32, 1
      %p92 = scmp.ne.s32.totalorder %s87, %s89
      %p93 = scmp.eq.s32.totalorder %s32, 0
      %p94 = por %p92, %p93
      %p95 = scmp.ne.s32.totalorder %s87, %s89
      %p96 = scmp.eq.s32.totalorder %s37, 1
      %p97 = por %p95, %p96
      %p98 = scmp.ne.s32.totalorder %s89, %s90
      %p99 = scmp.eq.s32.totalorder %s37, 0
      %p100 = por %p98, %p99
      %p101 = scmp.ne.s32.totalorder %s89, %s90
      %p102 = scmp.eq.s32.totalorder %s38, 1
      %p103 = por %p101, %p102
      %p105 = scmp.ne.s32.totalorder %s90, %s104
      %p106 = scmp.eq.s32.totalorder %s38, 0
      %p107 = por %p105, %p106
      %s109 = sadd.s32 %s108, 1
      %p112 = scmp.eq.s32.totalorder %s32, 1
      %p113 = scmp.ne.s32.totalorder %s108, %s110
      %p114 = scmp.eq.s32.totalorder %s32, 0
      %p115 = por %p113, %p114
      %p116 = scmp.ne.s32.totalorder %s108, %s110
      %p117 = scmp.eq.s32.totalorder %s37, 1
      %p118 = por %p116, %p117
      %p119 = scmp.ne.s32.totalorder %s110, %s111
      %p120 = scmp.eq.s32.totalorder %s37, 0
      %p121 = por %p119, %p120
      %p122 = scmp.ne.s32.totalorder %s110, %s111
      %p123 = scmp.eq.s32.totalorder %s38, 1
      %p124 = por %p122, %p123
      %p126 = scmp.ne.s32.totalorder %s111, %s125
      %p127 = scmp.eq.s32.totalorder %s38, 0
      %p128 = por %p126, %p127
      %s130 = sadd.s32 %s129, 1
      %p133 = scmp.eq.s32.totalorder %s32, 1
      %p134 = scmp.ne.s32.totalorder %s129, %s131
      %p135 = scmp.eq.s32.totalorder %s32, 0
      %p136 = por %p134, %p135
      %p137 = scmp.ne.s32.totalorder %s129, %s131
      %p138 = scmp.eq.s32.totalorder %s37, 1
      %p139 = por %p137, %p138
      %p140 = scmp.ne.s32.totalorder %s131, %s132
      %p141 = scmp.eq.s32.totalorder %s37, 0
      %p142 = por %p140, %p141
      %p143 = scmp.ne.s32.totalorder %s131, %s132
      %p144 = scmp.eq.s32.totalorder %s38, 1
      %p145 = por %p143, %p144
      %p147 = scmp.ne.s32.totalorder %s132, %s146
      %p148 = scmp.eq.s32.totalorder %s38, 0
      %p149 = por %p147, %p148
      %s151 = sadd.s32 %s150, 1
      %p154 = scmp.eq.s32.totalorder %s32, 1
      %p155 = scmp.ne.s32.totalorder %s150, %s152
      %p156 = scmp.eq.s32.totalorder %s32, 0
      %p157 = por %p155, %p156
      %p158 = scmp.ne.s32.totalorder %s150, %s152
      %p159 = scmp.eq.s32.totalorder %s37, 1
      %p160 = por %p158, %p159
      %p161 = scmp.ne.s32.totalorder %s152, %s153
      %p162 = scmp.eq.s32.totalorder %s37, 0
      %p163 = por %p161, %p162
      %p164 = scmp.ne.s32.totalorder %s152, %s153
      %p165 = scmp.eq.s32.totalorder %s38, 1
      %p166 = por %p164, %p165
      %p168 = scmp.ne.s32.totalorder %s153, %s167
      %p169 = scmp.eq.s32.totalorder %s38, 0
      %p170 = por %p168, %p169
      %s172 = sadd.s32 %s171, 1
      %p175 = scmp.eq.s32.totalorder %s32, 1
      %p176 = scmp.ne.s32.totalorder %s171, %s173
      %p177 = scmp.eq.s32.totalorder %s32, 0
      %p178 = por %p176, %p177
      %p179 = scmp.ne.s32.totalorder %s171, %s173
      %p180 = scmp.eq.s32.totalorder %s37, 1
      %p181 = por %p179, %p180
      %p182 = scmp.ne.s32.totalorder %s173, %s174
      %p183 = scmp.eq.s32.totalorder %s37, 0
      %p184 = por %p182, %p183
      %p185 = scmp.ne.s32.totalorder %s173, %s174
      %p186 = scmp.eq.s32.totalorder %s38, 1
      %p187 = por %p185, %p186
      %p189 = scmp.ne.s32.totalorder %s174, %s188
      %p190 = scmp.eq.s32.totalorder %s38, 0
      %p191 = por %p189, %p190
      %s193 = sadd.s32 %s192, 1
      %p196 = scmp.eq.s32.totalorder %s32, 1
      %p197 = scmp.ne.s32.totalorder %s192, %s194
      %p198 = scmp.eq.s32.totalorder %s32, 0
      %p199 = por %p197, %p198
      %p200 = scmp.ne.s32.totalorder %s192, %s194
      %p201 = scmp.eq.s32.totalorder %s37, 1
      %p202 = por %p200, %p201
      %p203 = scmp.ne.s32.totalorder %s194, %s195
      %p204 = scmp.eq.s32.totalorder %s37, 0
      %p205 = por %p203, %p204
      %p206 = scmp.ne.s32.totalorder %s194, %s195
      %p207 = scmp.eq.s32.totalorder %s38, 1
      %p208 = por %p206, %p207
      %p210 = scmp.ne.s32.totalorder %s195, %s209
      %p211 = scmp.eq.s32.totalorder %s38, 0
      %p212 = por %p210, %p211
      %s214 = sadd.s32 %s213, 1
      %p217 = scmp.eq.s32.totalorder %s32, 1
      %p218 = scmp.ne.s32.totalorder %s213, %s215
      %p219 = scmp.eq.s32.totalorder %s32, 0
      %p220 = por %p218, %p219
      %p221 = scmp.ne.s32.totalorder %s213, %s215
      %p222 = scmp.eq.s32.totalorder %s37, 1
      %p223 = por %p221, %p222
      %p224 = scmp.ne.s32.totalorder %s215, %s216
      %p225 = scmp.eq.s32.totalorder %s37, 0
      %p226 = por %p224, %p225
      %p227 = scmp.ne.s32.totalorder %s215, %s216
      %p228 = scmp.eq.s32.totalorder %s38, 1
      %p229 = por %p227, %p228
      %p231 = scmp.ne.s32.totalorder %s216, %s230
      %p232 = scmp.eq.s32.totalorder %s38, 0
      %p233 = por %p231, %p232
      %s235 = sadd.s32 %s234, 1
      %p238 = scmp.eq.s32.totalorder %s32, 1
      %p239 = scmp.ne.s32.totalorder %s234, %s236
      %p240 = scmp.eq.s32.totalorder %s32, 0
      %p241 = por %p239, %p240
      %p242 = scmp.ne.s32.totalorder %s234, %s236
      %p243 = scmp.eq.s32.totalorder %s37, 1
      %p244 = por %p242, %p243
      %p245 = scmp.ne.s32.totalorder %s236, %s237
      %p246 = scmp.eq.s32.totalorder %s37, 0
      %p247 = por %p245, %p246
      %p248 = scmp.ne.s32.totalorder %s236, %s237
      %p249 = scmp.eq.s32.totalorder %s38, 1
      %p250 = por %p248, %p249
      %p252 = scmp.ne.s32.totalorder %s237, %s251
      %p253 = scmp.eq.s32.totalorder %s38, 0
      %p254 = por %p252, %p253
      %s256 = sadd.s32 %s255, 1
      %p259 = scmp.eq.s32.totalorder %s32, 1
      %p260 = scmp.ne.s32.totalorder %s255, %s257
      %p261 = scmp.eq.s32.totalorder %s32, 0
      %p262 = por %p260, %p261
      %p263 = scmp.ne.s32.totalorder %s255, %s257
      %p264 = scmp.eq.s32.totalorder %s37, 1
      %p265 = por %p263, %p264
      %p266 = scmp.ne.s32.totalorder %s257, %s258
      %p267 = scmp.eq.s32.totalorder %s37, 0
      %p268 = por %p266, %p267
      %p269 = scmp.ne.s32.totalorder %s257, %s258
      %p270 = scmp.eq.s32.totalorder %s38, 1
      %p271 = por %p269, %p270
      %p273 = scmp.ne.s32.totalorder %s258, %s272
      %p274 = scmp.eq.s32.totalorder %s38, 0
      %p275 = por %p273, %p274
      %s277 = sadd.s32 %s276, 1
      %p280 = scmp.eq.s32.totalorder %s32, 1
      %p281 = scmp.ne.s32.totalorder %s276, %s278
      %p282 = scmp.eq.s32.totalorder %s32, 0
      %p283 = por %p281, %p282
      %p284 = scmp.ne.s32.totalorder %s276, %s278
      %p285 = scmp.eq.s32.totalorder %s37, 1
      %p286 = por %p284, %p285
      %p287 = scmp.ne.s32.totalorder %s278, %s279
      %p288 = scmp.eq.s32.totalorder %s37, 0
      %p289 = por %p287, %p288
      %p290 = scmp.ne.s32.totalorder %s278, %s279
      %p291 = scmp.eq.s32.totalorder %s38, 1
      %p292 = por %p290, %p291
      %p294 = scmp.ne.s32.totalorder %s279, %s293
      %p295 = scmp.eq.s32.totalorder %s38, 0
      %p296 = por %p294, %p295
      %s298 = sadd.s32 %s297, 1
      %p301 = scmp.eq.s32.totalorder %s32, 1
      %p302 = scmp.ne.s32.totalorder %s297, %s299
      %p303 = scmp.eq.s32.totalorder %s32, 0
      %p304 = por %p302, %p303
      %p305 = scmp.ne.s32.totalorder %s297, %s299
      %p306 = scmp.eq.s32.totalorder %s37, 1
      %p307 = por %p305, %p306
      %p308 = scmp.ne.s32.totalorder %s299, %s300
      %p309 = scmp.eq.s32.totalorder %s37, 0
      %p310 = por %p308, %p309
      %p311 = scmp.ne.s32.totalorder %s299, %s300
      %p312 = scmp.eq.s32.totalorder %s38, 1
      %p313 = por %p311, %p312
      %p315 = scmp.ne.s32.totalorder %s300, %s314
      %p316 = scmp.eq.s32.totalorder %s38, 0
      %p317 = por %p315, %p316
      %s319 = sadd.s32 %s318, 1
      %p322 = scmp.eq.s32.totalorder %s32, 1
      %p323 = scmp.ne.s32.totalorder %s318, %s320
      %p324 = scmp.eq.s32.totalorder %s32, 0
      %p325 = por %p323, %p324
      %p326 = scmp.ne.s32.totalorder %s318, %s320
      %p327 = scmp.eq.s32.totalorder %s37, 1
      %p328 = por %p326, %p327
      %p329 = scmp.ne.s32.totalorder %s320, %s321
      %p330 = scmp.eq.s32.totalorder %s37, 0
      %p331 = por %p329, %p330
      %p332 = scmp.ne.s32.totalorder %s320, %s321
      %p333 = scmp.eq.s32.totalorder %s38, 1
      %p334 = por %p332, %p333
      %p336 = scmp.ne.s32.totalorder %s321, %s335
      %p337 = scmp.eq.s32.totalorder %s38, 0
      %p338 = por %p336, %p337
      %s340 = sadd.s32 %s339, 1
      %p343 = scmp.eq.s32.totalorder %s32, 1
      %p344 = scmp.ne.s32.totalorder %s339, %s341
      %p345 = scmp.eq.s32.totalorder %s32, 0
      %p346 = por %p344, %p345
      %p347 = scmp.ne.s32.totalorder %s339, %s341
      %p348 = scmp.eq.s32.totalorder %s37, 1
      %p349 = por %p347, %p348
      %p350 = scmp.ne.s32.totalorder %s341, %s342
      %p351 = scmp.eq.s32.totalorder %s37, 0
      %p352 = por %p350, %p351
      %p353 = scmp.ne.s32.totalorder %s341, %s342
      %p354 = scmp.eq.s32.totalorder %s38, 1
      %p355 = por %p353, %p354
      %p357 = scmp.ne.s32.totalorder %s342, %s356
      %p358 = scmp.eq.s32.totalorder %s38, 0
      %p359 = por %p357, %p358
      %s361 = sadd.s32 %s360, 1
      %p364 = scmp.eq.s32.totalorder %s32, 1
      %p365 = scmp.ne.s32.totalorder %s360, %s362
      %p366 = scmp.eq.s32.totalorder %s32, 0
      %p367 = por %p365, %p366
      %p368 = scmp.ne.s32.totalorder %s360, %s362
      %p369 = scmp.eq.s32.totalorder %s37, 1
      %p370 = por %p368, %p369
      %p371 = scmp.ne.s32.totalorder %s362, %s363
      %p372 = scmp.eq.s32.totalorder %s37, 0
      %p373 = por %p371, %p372
      %p374 = scmp.ne.s32.totalorder %s362, %s363
      %p375 = scmp.eq.s32.totalorder %s38, 1
      %p376 = por %p374, %p375
      %p378 = scmp.ne.s32.totalorder %s363, %s377
      %p379 = scmp.eq.s32.totalorder %s38, 0
      %p380 = por %p378, %p379
      %s382 = sadd.s32 %s381, 1
      %p385 = scmp.eq.s32.totalorder %s32, 1
      %p386 = scmp.ne.s32.totalorder %s381, %s383
      %p387 = scmp.eq.s32.totalorder %s32, 0
      %p388 = por %p386, %p387
      %p389 = scmp.ne.s32.totalorder %s381, %s383
      %p390 = scmp.eq.s32.totalorder %s37, 1
      %p391 = por %p389, %p390
      %p392 = scmp.ne.s32.totalorder %s383, %s384
      %p393 = scmp.eq.s32.totalorder %s37, 0
      %p394 = por %p392, %p393
      %p395 = scmp.ne.s32.totalorder %s383, %s384
      %p396 = scmp.eq.s32.totalorder %s38, 1
      %p397 = por %p395, %p396
      %p399 = scmp.ne.s32.totalorder %s384, %s398
      %p400 = scmp.eq.s32.totalorder %s38, 0
      %p401 = por %p399, %p400
      %s403 = sadd.s32 %s402, 1
      %p406 = scmp.eq.s32.totalorder %s32, 1
      %p407 = scmp.ne.s32.totalorder %s402, %s404
      %p408 = scmp.eq.s32.totalorder %s32, 0
      %p409 = por %p407, %p408
      %p410 = scmp.ne.s32.totalorder %s402, %s404
      %p411 = scmp.eq.s32.totalorder %s37, 1
      %p412 = por %p410, %p411
      %p413 = scmp.ne.s32.totalorder %s404, %s405
      %p414 = scmp.eq.s32.totalorder %s37, 0
      %p415 = por %p413, %p414
      %p416 = scmp.ne.s32.totalorder %s404, %s405
      %p417 = scmp.eq.s32.totalorder %s38, 1
      %p418 = por %p416, %p417
      %p420 = scmp.ne.s32.totalorder %s405, %s419
      %p421 = scmp.eq.s32.totalorder %s38, 0
      %p422 = por %p420, %p421
      %s424 = sadd.s32 %s423, 1
      %p427 = scmp.eq.s32.totalorder %s32, 1
      %p428 = scmp.ne.s32.totalorder %s423, %s425
      %p429 = scmp.eq.s32.totalorder %s32, 0
      %p430 = por %p428, %p429
      %p431 = scmp.ne.s32.totalorder %s423, %s425
      %p432 = scmp.eq.s32.totalorder %s37, 1
      %p433 = por %p431, %p432
      %p434 = scmp.ne.s32.totalorder %s425, %s426
      %p435 = scmp.eq.s32.totalorder %s37, 0
      %p436 = por %p434, %p435
      %p437 = scmp.ne.s32.totalorder %s425, %s426
      %p438 = scmp.eq.s32.totalorder %s38, 1
      %p439 = por %p437, %p438
      %p441 = scmp.ne.s32.totalorder %s426, %s440
      %p442 = scmp.eq.s32.totalorder %s38, 0
      %p443 = por %p441, %p442
      %s445 = sadd.s32 %s444, 1
      %p448 = scmp.eq.s32.totalorder %s32, 1
      %p449 = scmp.ne.s32.totalorder %s444, %s446
      %p450 = scmp.eq.s32.totalorder %s32, 0
      %p451 = por %p449, %p450
      %p452 = scmp.ne.s32.totalorder %s444, %s446
      %p453 = scmp.eq.s32.totalorder %s37, 1
      %p454 = por %p452, %p453
      %p455 = scmp.ne.s32.totalorder %s446, %s447
      %p456 = scmp.eq.s32.totalorder %s37, 0
      %p457 = por %p455, %p456
      %p458 = scmp.ne.s32.totalorder %s446, %s447
      %p459 = scmp.eq.s32.totalorder %s38, 1
      %p460 = por %p458, %p459
      %p462 = scmp.ne.s32.totalorder %s447, %s461
      %p463 = scmp.eq.s32.totalorder %s38, 0
      %p464 = por %p462, %p463
      %s466 = sadd.s32 %s465, 1
      %p469 = scmp.eq.s32.totalorder %s32, 1
      %p470 = scmp.ne.s32.totalorder %s465, %s467
      %p471 = scmp.eq.s32.totalorder %s32, 0
      %p472 = por %p470, %p471
      %p473 = scmp.ne.s32.totalorder %s465, %s467
      %p474 = scmp.eq.s32.totalorder %s37, 1
      %p475 = por %p473, %p474
      %p476 = scmp.ne.s32.totalorder %s467, %s468
      %p477 = scmp.eq.s32.totalorder %s37, 0
      %p478 = por %p476, %p477
      %p479 = scmp.ne.s32.totalorder %s467, %s468
      %p480 = scmp.eq.s32.totalorder %s38, 1
      %p481 = por %p479, %p480
      %p483 = scmp.ne.s32.totalorder %s468, %s482
      %p484 = scmp.eq.s32.totalorder %s38, 0
      %p485 = por %p483, %p484
      %s486 = ssub.s32 %s32, %s39
      %p487 = scmp.eq.s32.totalorder %s486, 0
      %s489 = sadd.s32 %s488, 1
      %s490 = scalar_select %p487, %s488, %s489
      %p493 = pneg %p487
      %p494 = scmp.eq.s32.totalorder %s32, 1
      %p495 = por %p493, %p494
      %p496 = scmp.ne.s32.totalorder %s488, %s491
      %p497 = scmp.eq.s32.totalorder %s32, 0
      %p498 = por %p496, %p497
      %p499 = scmp.ne.s32.totalorder %s488, %s491
      %p500 = scmp.eq.s32.totalorder %s37, 1
      %p501 = por %p499, %p500
      %p502 = scmp.ne.s32.totalorder %s491, %s492
      %p503 = scmp.eq.s32.totalorder %s37, 0
      %p504 = por %p502, %p503
      %p505 = scmp.ne.s32.totalorder %s491, %s492
      %p506 = scmp.eq.s32.totalorder %s38, 1
      %p507 = por %p505, %p506
      %p509 = scmp.ne.s32.totalorder %s492, %s508
      %p510 = scmp.eq.s32.totalorder %s38, 0
      %p511 = por %p509, %p510
      %p512 = scmp.le.s32.totalorder 1, %s32
      %p513 = scmp.lt.s32.totalorder %s32, 3
      %p514 = pnand %p512, %p513
      %p515 = pneg %p514
      // Predicated region
      $region9: #{_lambda_.1} parent=5 // pred_check
        _
      $region10: #{_lambda_.1} parent=5 // pred_check_branch
        %517 = sbr.rel (%p514) target = $region12
      $region11: #{_lambda_.1} parent=5 // pred_region
        %s518 = ssub.s32 %s32, 1
        // Predicated region
        $region13: #{_lambda_.1} parent=11 // pred_check
          %p519 = pneg %p79
        $region14: #{_lambda_.1} parent=11 // pred_check_branch
          %521 = sbr.rel (%p519) target = $region16
        $region15: #{_lambda_.1} parent=11 // pred_region
          _
        $region16: #{_lambda_.1} parent=11 // pred_fallthru
          _
        // Predicated region
        $region17: #{_lambda_.1} parent=11 // pred_check
          %p522 = pneg %p100
        $region18: #{_lambda_.1} parent=11 // pred_check_branch
          %524 = sbr.rel (%p522) target = $region20
        $region19: #{_lambda_.1} parent=11 // pred_region
          _
        $region20: #{_lambda_.1} parent=11 // pred_fallthru
          _
        // Predicated region
        $region21: #{_lambda_.1} parent=11 // pred_check
          %p525 = pneg %p121
        $region22: #{_lambda_.1} parent=11 // pred_check_branch
          %527 = sbr.rel (%p525) target = $region24
        $region23: #{_lambda_.1} parent=11 // pred_region
          _
        $region24: #{_lambda_.1} parent=11 // pred_fallthru
          _
        // Predicated region
        $region25: #{_lambda_.1} parent=11 // pred_check
          %p528 = pneg %p142
        $region26: #{_lambda_.1} parent=11 // pred_check_branch
          %530 = sbr.rel (%p528) target = $region28
        $region27: #{_lambda_.1} parent=11 // pred_region
          _
        $region28: #{_lambda_.1} parent=11 // pred_fallthru
          _
        // Predicated region
        $region29: #{_lambda_.1} parent=11 // pred_check
          %p531 = pneg %p163
        $region30: #{_lambda_.1} parent=11 // pred_check_branch
          %533 = sbr.rel (%p531) target = $region32
        $region31: #{_lambda_.1} parent=11 // pred_region
          _
        $region32: #{_lambda_.1} parent=11 // pred_fallthru
          _
        // Predicated region
        $region33: #{_lambda_.1} parent=11 // pred_check
          %p534 = pneg %p184
        $region34: #{_lambda_.1} parent=11 // pred_check_branch
          %536 = sbr.rel (%p534) target = $region36
        $region35: #{_lambda_.1} parent=11 // pred_region
          _
        $region36: #{_lambda_.1} parent=11 // pred_fallthru
          _
        // Predicated region
        $region37: #{_lambda_.1} parent=11 // pred_check
          %p537 = pneg %p205
        $region38: #{_lambda_.1} parent=11 // pred_check_branch
          %539 = sbr.rel (%p537) target = $region40
        $region39: #{_lambda_.1} parent=11 // pred_region
          _
        $region40: #{_lambda_.1} parent=11 // pred_fallthru
          _
        // Predicated region
        $region41: #{_lambda_.1} parent=11 // pred_check
          %p540 = pneg %p226
        $region42: #{_lambda_.1} parent=11 // pred_check_branch
          %542 = sbr.rel (%p540) target = $region44
        $region43: #{_lambda_.1} parent=11 // pred_region
          _
        $region44: #{_lambda_.1} parent=11 // pred_fallthru
          _
        // Predicated region
        $region45: #{_lambda_.1} parent=11 // pred_check
          %p543 = pneg %p247
        $region46: #{_lambda_.1} parent=11 // pred_check_branch
          %545 = sbr.rel (%p543) target = $region48
        $region47: #{_lambda_.1} parent=11 // pred_region
          _
        $region48: #{_lambda_.1} parent=11 // pred_fallthru
          _
        // Predicated region
        $region49: #{_lambda_.1} parent=11 // pred_check
          %p546 = pneg %p268
        $region50: #{_lambda_.1} parent=11 // pred_check_branch
          %548 = sbr.rel (%p546) target = $region52
        $region51: #{_lambda_.1} parent=11 // pred_region
          _
        $region52: #{_lambda_.1} parent=11 // pred_fallthru
          _
        // Predicated region
        $region53: #{_lambda_.1} parent=11 // pred_check
          %p549 = pneg %p289
        $region54: #{_lambda_.1} parent=11 // pred_check_branch
          %551 = sbr.rel (%p549) target = $region56
        $region55: #{_lambda_.1} parent=11 // pred_region
          _
        $region56: #{_lambda_.1} parent=11 // pred_fallthru
          _
        // Predicated region
        $region57: #{_lambda_.1} parent=11 // pred_check
          %p552 = pneg %p310
        $region58: #{_lambda_.1} parent=11 // pred_check_branch
          %554 = sbr.rel (%p552) target = $region60
        $region59: #{_lambda_.1} parent=11 // pred_region
          _
        $region60: #{_lambda_.1} parent=11 // pred_fallthru
          _
        // Predicated region
        $region61: #{_lambda_.1} parent=11 // pred_check
          %p555 = pneg %p331
        $region62: #{_lambda_.1} parent=11 // pred_check_branch
          %557 = sbr.rel (%p555) target = $region64
        $region63: #{_lambda_.1} parent=11 // pred_region
          _
        $region64: #{_lambda_.1} parent=11 // pred_fallthru
          _
        // Predicated region
        $region65: #{_lambda_.1} parent=11 // pred_check
          %p558 = pneg %p352
        $region66: #{_lambda_.1} parent=11 // pred_check_branch
          %560 = sbr.rel (%p558) target = $region68
        $region67: #{_lambda_.1} parent=11 // pred_region
          _
        $region68: #{_lambda_.1} parent=11 // pred_fallthru
          _
        // Predicated region
        $region69: #{_lambda_.1} parent=11 // pred_check
          %p561 = pneg %p373
        $region70: #{_lambda_.1} parent=11 // pred_check_branch
          %563 = sbr.rel (%p561) target = $region72
        $region71: #{_lambda_.1} parent=11 // pred_region
          _
        $region72: #{_lambda_.1} parent=11 // pred_fallthru
          _
        // Predicated region
        $region73: #{_lambda_.1} parent=11 // pred_check
          %p564 = pneg %p394
        $region74: #{_lambda_.1} parent=11 // pred_check_branch
          %566 = sbr.rel (%p564) target = $region76
        $region75: #{_lambda_.1} parent=11 // pred_region
          _
        $region76: #{_lambda_.1} parent=11 // pred_fallthru
          _
        // Predicated region
        $region77: #{_lambda_.1} parent=11 // pred_check
          %p567 = pneg %p415
        $region78: #{_lambda_.1} parent=11 // pred_check_branch
          %569 = sbr.rel (%p567) target = $region80
        $region79: #{_lambda_.1} parent=11 // pred_region
          _
        $region80: #{_lambda_.1} parent=11 // pred_fallthru
          _
        // Predicated region
        $region81: #{_lambda_.1} parent=11 // pred_check
          %p570 = pneg %p436
        $region82: #{_lambda_.1} parent=11 // pred_check_branch
          %572 = sbr.rel (%p570) target = $region84
        $region83: #{_lambda_.1} parent=11 // pred_region
          _
        $region84: #{_lambda_.1} parent=11 // pred_fallthru
          _
        // Predicated region
        $region85: #{_lambda_.1} parent=11 // pred_check
          %p573 = pneg %p457
        $region86: #{_lambda_.1} parent=11 // pred_check_branch
          %575 = sbr.rel (%p573) target = $region88
        $region87: #{_lambda_.1} parent=11 // pred_region
          _
        $region88: #{_lambda_.1} parent=11 // pred_fallthru
          _
        // Predicated region
        $region89: #{_lambda_.1} parent=11 // pred_check
          %p576 = pneg %p478
        $region90: #{_lambda_.1} parent=11 // pred_check_branch
          %578 = sbr.rel (%p576) target = $region92
        $region91: #{_lambda_.1} parent=11 // pred_region
          _
        $region92: #{_lambda_.1} parent=11 // pred_fallthru
          _
      $region12: #{_lambda_.1} parent=5 // pred_fallthru
        _
      %p579 = scmp.lt.s32.totalorder %s32, 2
      // Predicated region
      $region93: #{_lambda_.1} parent=5 // pred_check
        %p580 = pneg %p579
      $region94: #{_lambda_.1} parent=5 // pred_check_branch
        %582 = sbr.rel (%p580) target = $region96
      $region95: #{_lambda_.1} parent=5 // pred_region
        // Predicated region
        $region97: #{_lambda_.1} parent=95 // pred_check
          %p583 = pneg %p52
        $region98: #{_lambda_.1} parent=95 // pred_check_branch
          %585 = sbr.rel (%p583) target = $region100
        $region99: #{_lambda_.1} parent=95 // pred_region
          %p586 = scmp.lt.s32.totalorder %s32, 1
          %s587 = scalar_select %p586, %s32, 1
          %s588 = smul.addr %s587, 8
          %s589 = scalar_lea.vmem %s0, %s588
        $region100: #{_lambda_.1} parent=95 // pred_fallthru
          _
      $region96: #{_lambda_.1} parent=5 // pred_fallthru
        _
      %p590 = scmp.le.s32.totalorder 1, %s32
      %p591 = scmp.lt.s32.totalorder %s32, 3
      %p592 = pnand %p590, %p591
      %p593 = pneg %p592
      // Predicated region
      $region101: #{_lambda_.1} parent=5 // pred_check
        _
      $region102: #{_lambda_.1} parent=5 // pred_check_branch
        %595 = sbr.rel (%p592) target = $region104
      $region103: #{_lambda_.1} parent=5 // pred_region
        %s596 = ssub.s32 %s32, 1
        %p597 = scmp.lt.s32.totalorder %s37, 1
        %s598 = scalar_select %p597, %s37, 1
        %s599 = smul.addr %s598, 8
        %s600 = scalar_lea.vmem %s0, %s599
        %p601 = pneg %p58
        %p602 = pneg %p55
        %p603 = pneg %p79
        %p604 = pneg %p76
        %p605 = pneg %p100
        %p606 = pneg %p97
        %p607 = pneg %p121
        %p608 = pneg %p118
        %p609 = pneg %p142
        %p610 = pneg %p139
        %p611 = pneg %p163
        %p612 = pneg %p160
        %p613 = pneg %p184
        %p614 = pneg %p181
        %p615 = pneg %p205
        %p616 = pneg %p202
        %p617 = pneg %p226
        %p618 = pneg %p223
        %p619 = pneg %p247
        %p620 = pneg %p244
        %p621 = pneg %p268
        %p622 = pneg %p265
        %p623 = pneg %p289
        %p624 = pneg %p286
        %p625 = pneg %p310
        %p626 = pneg %p307
        %p627 = pneg %p331
        %p628 = pneg %p328
        %p629 = pneg %p352
        %p630 = pneg %p349
        %p631 = pneg %p373
        %p632 = pneg %p370
        %p633 = pneg %p394
        %p634 = pneg %p391
        %p635 = pneg %p415
        %p636 = pneg %p412
        %p637 = pneg %p436
        %p638 = pneg %p433
        %p639 = pneg %p457
        %p640 = pneg %p454
        %p641 = pneg %p478
        %p642 = pneg %p475
        %p643 = pneg %p504
        %p644 = pneg %p501
        %s645 = sand.u32 %s491, 1
        %s646 = scalar_lea.sflag [#allocation5], %s645
        %s647 = sand.u32 %s491, 1
        %s648 = scalar_lea.vmem [#allocation4], %s647
        %p649 = scmp.lt.s32.totalorder %s37, 1
        %s650 = scalar_select %p649, %s37, 1
        %s651 = smul.addr %s650, 8
        %s652 = scalar_lea.vmem %s0, %s651
        %v653 = vld [vmem:[%s652] sm:$0xff]
        %v654 = vld [vmem:[%s1] sm:$0xff]
        %v655 = vld [vmem:[%s2] sm:$0xff]
        %657 = vrot.lane.b32.xlu0 %v653, 2
        %v658 = vpop.permute.xlu0 %657
        %vm660 = vcmask 15360
        %v661 = vsel %vm660, 0.0, %v658
        %vm662 = vcmask 261120
        %663 = vst.msk [vmem:[#allocation2] sm:$0xff] %vm662, %v661
        %664 = vrot.lane.b32.xlu0 %v653, 1
        %v665 = vpop.permute.xlu0 %664
        %vm667 = vcmask 7168
        %v668 = vsel %vm667, 0.0, %v665
        %669 = vst.msk [vmem:[#allocation2 + $0x8] sm:$0xff] %vm662, %v668
        %670 = vst.msk [vmem:[#allocation2 + $0x10] sm:$0xff] %vm662, %v653
        %671 = vrot.lane.b32.xlu0 %v653, 127
        %v672 = vpop.permute.xlu0 %671
        %vm674 = vcmask 252928
        %v675 = vsel %vm674, %v672, 0.0
        %676 = vst.msk [vmem:[#allocation2 + $0x18] sm:$0xff] %vm662, %v675
        %677 = vrot.lane.b32.xlu0 %v653, 126
        %v678 = vpop.permute.xlu0 %677
        %vm680 = vcmask 244736
        %v681 = vsel %vm680, %v678, 0.0
        %682 = vst.msk [vmem:[#allocation2 + $0x20] sm:$0xff] %vm662, %v681
        %v683 = vld [vmem:[#allocation2] sm:$0xff]
        %v684 = vld [vmem:[#allocation2 + $0x8] sm:$0xff]
        %v685 = vld [vmem:[#allocation2 + $0x10] sm:$0xff]
        %v686 = vld [vmem:[#allocation2 + $0x18] sm:$0xff]
        %v687 = vld [vmem:[#allocation2 + $0x20] sm:$0xff]
        %689 = vset.pattern.permute.xlu0 0
        %690 = vperm.xlu0 %689, %v655
        %v691 = vpop.permute.xlu0 %690
        %vm693 = vcmask 326656
        %v695 = vsel %vm693, %v654, 0
        %697 = vmatprep.subr.mxu0 0.0
        %698 = vmatpush1.msra.mxu0 %v683
        %699 = vmatprep.subr.mxu0 0.0
        %700 = vmatpush1.msra.mxu0 %v684
        %701 = vmatprep.subr.mxu0 0.0
        %702 = vmatpush1.msra.mxu0 %v685
        %703 = vmatprep.subr.mxu0 0.0
        %704 = vmatpush1.msra.mxu0 %v686
        %705 = vmatprep.subr.mxu0 0.0
        %706 = vmatpush1.msra.mxu0 %v687
        %707 = vmatprep.subr.mxu0 0.0
        %708 = vmatpush1.msra.mxu0 0.0
        %709 = vmatprep.subr.mxu0 0.0
        %710 = vmatpush1.msra.mxu0 0.0
        %711 = vmatprep.subr.mxu0 0.0
        %712 = vmatpush1.msra.mxu0 0.0
        %713 = vmatprep.subr.mxu0 0.0
        %714 = vmatpush1.msra.mxu0 0.0
        %715 = vmatprep.subr.mxu0 0.0
        %716 = vmatpush1.msra.mxu0 0.0
        %717 = vmatprep.subr.mxu0 0.0
        %718 = vmatpush1.msra.mxu0 0.0
        %719 = vmatprep.subr.mxu0 0.0
        %720 = vmatpush1.msra.mxu0 0.0
        %721 = vmatprep.subr.mxu0 0.0
        %722 = vmatpush1.msra.mxu0 0.0
        %723 = vmatprep.subr.mxu0 0.0
        %724 = vmatpush1.msra.mxu0 0.0
        %725 = vmatprep.subr.mxu0 0.0
        %726 = vmatpush1.msra.mxu0 0.0
        %727 = vmatprep.subr.mxu0 0.0
        %728 = vmatpush1.msra.mxu0 0.0
        %729 = vmatprep.subr.mxu0 0.0
        %730 = vmatpush1.msra.mxu0 0.0
        %731 = vmatprep.subr.mxu0 0.0
        %732 = vmatpush1.msra.mxu0 0.0
        %733 = vmatprep.subr.mxu0 0.0
        %734 = vmatpush1.msra.mxu0 0.0
        %735 = vmatprep.subr.mxu0 0.0
        %736 = vmatpush1.msra.mxu0 0.0
        %737 = vmatprep.subr.mxu0 0.0
        %738 = vmatpush1.msra.mxu0 0.0
        %739 = vmatprep.subr.mxu0 0.0
        %740 = vmatpush1.msra.mxu0 0.0
        %741 = vmatprep.subr.mxu0 0.0
        %742 = vmatpush1.msra.mxu0 0.0
        %743 = vmatprep.subr.mxu0 0.0
        %744 = vmatpush1.msra.mxu0 0.0
        %745 = vmatprep.subr.mxu0 0.0
        %746 = vmatpush1.msra.mxu0 0.0
        %747 = vmatprep.subr.mxu0 0.0
        %748 = vmatpush1.msra.mxu0 0.0
        %749 = vmatprep.subr.mxu0 0.0
        %750 = vmatpush1.msra.mxu0 0.0
        %751 = vmatprep.subr.mxu0 0.0
        %752 = vmatpush1.msra.mxu0 0.0
        %753 = vmatprep.subr.mxu0 0.0
        %754 = vmatpush1.msra.mxu0 0.0
        %755 = vmatprep.subr.mxu0 0.0
        %756 = vmatpush1.msra.mxu0 0.0
        %757 = vmatprep.subr.mxu0 0.0
        %758 = vmatpush1.msra.mxu0 0.0
        %759 = vmatprep.subr.mxu0 0.0
        %760 = vmatpush1.msra.mxu0 0.0
        %761 = vmatprep.mubr.f32.mxu0 0.0
        %762 = vmatmul.mubr.f32.gmra.mrb[0].mxu0 %v695
        %v763 = vpop.f32.mrb[0].mxu0
        %v764 = vadd.f32 %v691, %v763
        %v765 = vpop.f32.mrb[0].mxu0
        %766 = vdwg.mxu0
        %v767 = vmax.f32 %v764, 0.0
        %769 = vrot.lane.b32.xlu0 %v767, 127
        %v770 = vpop.permute.xlu0 %769
        %v772 = vsel %vm674, %v770, 0.0
        %v773 = vmax.f32 %v767, %v772
        %v774 = vld [vmem:[%s3] sm:$0xff]
        %v775 = vld [vmem:[%s3 + $0x8] sm:$0xff]
        %v776 = vld [vmem:[%s4] sm:$0xff]
        %v777 = vld [vmem:[%s4 + $0x8] sm:$0xff]
        %779 = vrot.lane.b32.xlu0 %v773, 4
        %v780 = vpop.permute.xlu0 %779
        %vm782 = vcmask 31744
        %v783 = vsel %vm782, 0.0, %v780
        %784 = vst.msk [vmem:[#allocation2] sm:$0xff] %vm662, %v783
        %785 = vrot.lane.b32.xlu0 %v773, 2
        %v786 = vpop.permute.xlu0 %785
        %v788 = vsel %vm660, 0.0, %v786
        %789 = vst.msk [vmem:[#allocation2 + $0x8] sm:$0xff] %vm662, %v788
        %790 = vst.msk [vmem:[#allocation2 + $0x10] sm:$0xff] %vm662, %v773
        %791 = vrot.lane.b32.xlu0 %v773, 126
        %v792 = vpop.permute.xlu0 %791
        %v794 = vsel %vm680, %v792, 0.0
        %795 = vst.msk [vmem:[#allocation2 + $0x18] sm:$0xff] %vm662, %v794
        %796 = vrot.lane.b32.xlu0 %v773, 124
        %v797 = vpop.permute.xlu0 %796
        %vm799 = vcmask 228352
        %v800 = vsel %vm799, %v797, 0.0
        %801 = vst.msk [vmem:[#allocation2 + $0x20] sm:$0xff] %vm662, %v800
        %v802 = vld [vmem:[#allocation2] sm:$0xff]
        %v803 = vld [vmem:[#allocation2 + $0x8] sm:$0xff]
        %v804 = vld [vmem:[#allocation2 + $0x10] sm:$0xff]
        %v805 = vld [vmem:[#allocation2 + $0x18] sm:$0xff]
        %v806 = vld [vmem:[#allocation2 + $0x20] sm:$0xff]
        %808 = vset.pattern.permute.xlu0 0
        %809 = vperm.xlu0 %808, %v776
        %v810 = vpop.permute.xlu0 %809
        %813 = vset.pattern.permute.xlu0 0
        %814 = vperm.xlu0 %813, %v777
        %v815 = vpop.permute.xlu0 %814
        %v818 = vsel %vm693, %v774, 0
        %v821 = vsel %vm693, %v775, 0
        %823 = vmatprep.subr.mxu0 0.0
        %824 = vmatpush1.msra.mxu0 %v802
        %825 = vmatprep.subr.mxu0 0.0
        %826 = vmatpush1.msra.mxu0 %v803
        %827 = vmatprep.subr.mxu0 0.0
        %828 = vmatpush1.msra.mxu0 %v804
        %829 = vmatprep.subr.mxu0 0.0
        %830 = vmatpush1.msra.mxu0 %v805
        %831 = vmatprep.subr.mxu0 0.0
        %832 = vmatpush1.msra.mxu0 %v806
        %833 = vmatprep.subr.mxu0 0.0
        %834 = vmatpush1.msra.mxu0 0.0
        %835 = vmatprep.subr.mxu0 0.0
        %836 = vmatpush1.msra.mxu0 0.0
        %837 = vmatprep.subr.mxu0 0.0
        %838 = vmatpush1.msra.mxu0 0.0
        %839 = vmatprep.subr.mxu0 0.0
        %840 = vmatpush1.msra.mxu0 0.0
        %841 = vmatprep.subr.mxu0 0.0
        %842 = vmatpush1.msra.mxu0 0.0
        %843 = vmatprep.subr.mxu0 0.0
        %844 = vmatpush1.msra.mxu0 0.0
        %845 = vmatprep.subr.mxu0 0.0
        %846 = vmatpush1.msra.mxu0 0.0
        %847 = vmatprep.subr.mxu0 0.0
        %848 = vmatpush1.msra.mxu0 0.0
        %849 = vmatprep.subr.mxu0 0.0
        %850 = vmatpush1.msra.mxu0 0.0
        %851 = vmatprep.subr.mxu0 0.0
        %852 = vmatpush1.msra.mxu0 0.0
        %853 = vmatprep.subr.mxu0 0.0
        %854 = vmatpush1.msra.mxu0 0.0
        %855 = vmatprep.subr.mxu0 0.0
        %856 = vmatpush1.msra.mxu0 0.0
        %857 = vmatprep.subr.mxu0 0.0
        %858 = vmatpush1.msra.mxu0 0.0
        %859 = vmatprep.subr.mxu0 0.0
        %860 = vmatpush1.msra.mxu0 0.0
        %861 = vmatprep.subr.mxu0 0.0
        %862 = vmatpush1.msra.mxu0 0.0
        %863 = vmatprep.subr.mxu0 0.0
        %864 = vmatpush1.msra.mxu0 0.0
        %865 = vmatprep.subr.mxu0 0.0
        %866 = vmatpush1.msra.mxu0 0.0
        %867 = vmatprep.subr.mxu0 0.0
        %868 = vmatpush1.msra.mxu0 0.0
        %869 = vmatprep.subr.mxu0 0.0
        %870 = vmatpush1.msra.mxu0 0.0
        %871 = vmatprep.subr.mxu0 0.0
        %872 = vmatpush1.msra.mxu0 0.0
        %873 = vmatprep.subr.mxu0 0.0
        %874 = vmatpush1.msra.mxu0 0.0
        %875 = vmatprep.subr.mxu0 0.0
        %876 = vmatpush1.msra.mxu0 0.0
        %877 = vmatprep.subr.mxu0 0.0
        %878 = vmatpush1.msra.mxu0 0.0
        %879 = vmatprep.subr.mxu0 0.0
        %880 = vmatpush1.msra.mxu0 0.0
        %881 = vmatprep.subr.mxu0 0.0
        %882 = vmatpush1.msra.mxu0 0.0
        %883 = vmatprep.subr.mxu0 0.0
        %884 = vmatpush1.msra.mxu0 0.0
        %885 = vmatprep.subr.mxu0 0.0
        %886 = vmatpush1.msra.mxu0 0.0
        %887 = vmatprep.mubr.f32.mxu0 0.0
        %888 = vmatmul.mubr.f32.gmra.mrb[0].mxu0 %v818
        %v889 = vpop.f32.mrb[0].mxu0
        %v890 = vadd.f32 %v810, %v889
        %v891 = vpop.f32.mrb[0].mxu0
        %892 = vmatprep.mubr.f32.mxu0 0.0
        %893 = vmatmul.mubr.f32.gmra.mrb[0].mxu0 %v821
        %v894 = vpop.f32.mrb[0].mxu0
        %v895 = vadd.f32 %v815, %v894
        %v896 = vpop.f32.mrb[0].mxu0
        %897 = vdwg.mxu0
        %v898 = vmax.f32 %v890, 0.0
        %v899 = vmax.f32 %v895, 0.0
        %902 = vrot.lane.b32.xlu0 %v898, 126
        %v903 = vpop.permute.xlu0 %902
        %904 = vrot.lane.b32.xlu0 %v899, 126
        %v905 = vpop.permute.xlu0 %904
        %v908 = vsel %vm680, %v903, 0.0
        %v909 = vsel %vm680, %v905, 0.0
        %v910 = vmax.f32 %v898, %v908
        %v911 = vmax.f32 %v899, %v909
        %v912 = vld [vmem:[%s5] sm:$0xff]
        %v913 = vld [vmem:[%s5 + $0x8] sm:$0xff]
        %v914 = vld [vmem:[%s5 + $0x10] sm:$0xff]
        %v915 = vld [vmem:[%s6] sm:$0xff]
        %v916 = vld [vmem:[%s6 + $0x8] sm:$0xff]
        %v917 = vld [vmem:[%s6 + $0x10] sm:$0xff]
        %920 = vrot.lane.b32.xlu0 %v910, 8
        %v921 = vpop.permute.xlu0 %920
        %922 = vrot.lane.b32.xlu0 %v911, 8
        %v923 = vpop.permute.xlu0 %922
        %vm926 = vcmask 64512
        %v927 = vsel %vm926, 0.0, %v921
        %v928 = vsel %vm926, 0.0, %v923
        %929 = vst.msk [vmem:[#allocation2] sm:$0xff] %vm662, %v927
        %930 = vst.msk [vmem:[#allocation2 + $0x8] sm:$0xff] %vm662, %v928
        %931 = vrot.lane.b32.xlu0 %v910, 4
        %v932 = vpop.permute.xlu0 %931
        %933 = vrot.lane.b32.xlu0 %v911, 4
        %v934 = vpop.permute.xlu0 %933
        %v937 = vsel %vm782, 0.0, %v932
        %v938 = vsel %vm782, 0.0, %v934
        %939 = vst.msk [vmem:[#allocation2 + $0x10] sm:$0xff] %vm662, %v937
        %940 = vst.msk [vmem:[#allocation2 + $0x18] sm:$0xff] %vm662, %v938
        %941 = vst.msk [vmem:[#allocation2 + $0x20] sm:$0xff] %vm662, %v910
        %942 = vst.msk [vmem:[#allocation2 + $0x28] sm:$0xff] %vm662, %v911
        %943 = vrot.lane.b32.xlu0 %v910, 124
        %v944 = vpop.permute.xlu0 %943
        %945 = vrot.lane.b32.xlu0 %v911, 124
        %v946 = vpop.permute.xlu0 %945
        %v949 = vsel %vm799, %v944, 0.0
        %v950 = vsel %vm799, %v946, 0.0
        %951 = vst.msk [vmem:[#allocation2 + $0x30] sm:$0xff] %vm662, %v949
        %952 = vst.msk [vmem:[#allocation2 + $0x38] sm:$0xff] %vm662, %v950
        %953 = vrot.lane.b32.xlu0 %v910, 120
        %v954 = vpop.permute.xlu0 %953
        %955 = vrot.lane.b32.xlu0 %v911, 120
        %v956 = vpop.permute.xlu0 %955
        %vm959 = vcmask 195584
        %v960 = vsel %vm959, %v954, 0.0
        %v961 = vsel %vm959, %v956, 0.0
        %962 = vst.msk [vmem:[#allocation2 + $0x40] sm:$0xff] %vm662, %v960
        %963 = vst.msk [vmem:[#allocation2 + $0x48] sm:$0xff] %vm662, %v961
        %v964 = vld [vmem:[#allocation2] sm:$0xff]
        %v965 = vld [vmem:[#allocation2 + $0x8] sm:$0xff]
        %v966 = vld [vmem:[#allocation2 + $0x10] sm:$0xff]
        %v967 = vld [vmem:[#allocation2 + $0x18] sm:$0xff]
        %v968 = vld [vmem:[#allocation2 + $0x20] sm:$0xff]
        %v969 = vld [vmem:[#allocation2 + $0x28] sm:$0xff]
        %v970 = vld [vmem:[#allocation2 + $0x30] sm:$0xff]
        %v971 = vld [vmem:[#allocation2 + $0x38] sm:$0xff]
        %v972 = vld [vmem:[#allocation2 + $0x40] sm:$0xff]
        %v973 = vld [vmem:[#allocation2 + $0x48] sm:$0xff]
        %975 = vset.pattern.permute.xlu0 0
        %976 = vperm.xlu0 %975, %v915
        %v977 = vpop.permute.xlu0 %976
        %980 = vset.pattern.permute.xlu0 0
        %981 = vperm.xlu0 %980, %v916
        %v982 = vpop.permute.xlu0 %981
        %985 = vset.pattern.permute.xlu0 0
        %986 = vperm.xlu0 %985, %v917
        %v987 = vpop.permute.xlu0 %986
        %vm989 = vcmask 654336
        %v991 = vsel %vm989, %v912, 0
        %v994 = vsel %vm989, %v913, 0
        %v997 = vsel %vm989, %v914, 0
        %999 = vmatprep.subr.mxu0 0.0
        %1000 = vmatpush1.msra.mxu0 %v964
        %1001 = vmatprep.subr.mxu0 0.0
        %1002 = vmatpush1.msra.mxu0 %v965
        %1003 = vmatprep.subr.mxu0 0.0
        %1004 = vmatpush1.msra.mxu0 %v966
        %1005 = vmatprep.subr.mxu0 0.0
        %1006 = vmatpush1.msra.mxu0 %v967
        %1007 = vmatprep.subr.mxu0 0.0
        %1008 = vmatpush1.msra.mxu0 %v968
        %1009 = vmatprep.subr.mxu0 0.0
        %1010 = vmatpush1.msra.mxu0 %v969
        %1011 = vmatprep.subr.mxu0 0.0
        %1012 = vmatpush1.msra.mxu0 %v970
        %1013 = vmatprep.subr.mxu0 0.0
        %1014 = vmatpush1.msra.mxu0 %v971
        %1015 = vmatprep.subr.mxu0 0.0
        %1016 = vmatpush1.msra.mxu0 %v972
        %1017 = vmatprep.subr.mxu0 0.0
        %1018 = vmatpush1.msra.mxu0 %v973
        %1019 = vmatprep.subr.mxu0 0.0
        %1020 = vmatpush1.msra.mxu0 0.0
        %1021 = vmatprep.subr.mxu0 0.0
        %1022 = vmatpush1.msra.mxu0 0.0
        %1023 = vmatprep.subr.mxu0 0.0
        %1024 = vmatpush1.msra.mxu0 0.0
        %1025 = vmatprep.subr.mxu0 0.0
        %1026 = vmatpush1.msra.mxu0 0.0
        %1027 = vmatprep.subr.mxu0 0.0
        %1028 = vmatpush1.msra.mxu0 0.0
        %1029 = vmatprep.subr.mxu0 0.0
        %1030 = vmatpush1.msra.mxu0 0.0
        %1031 = vmatprep.subr.mxu0 0.0
        %1032 = vmatpush1.msra.mxu0 0.0
        %1033 = vmatprep.subr.mxu0 0.0
        %1034 = vmatpush1.msra.mxu0 0.0
        %1035 = vmatprep.subr.mxu0 0.0
        %1036 = vmatpush1.msra.mxu0 0.0
        %1037 = vmatprep.subr.mxu0 0.0
        %1038 = vmatpush1.msra.mxu0 0.0
        %1039 = vmatprep.subr.mxu0 0.0
        %1040 = vmatpush1.msra.mxu0 0.0
        %1041 = vmatprep.subr.mxu0 0.0
        %1042 = vmatpush1.msra.mxu0 0.0
        %1043 = vmatprep.subr.mxu0 0.0
        %1044 = vmatpush1.msra.mxu0 0.0
        %1045 = vmatprep.subr.mxu0 0.0
        %1046 = vmatpush1.msra.mxu0 0.0
        %1047 = vmatprep.subr.mxu0 0.0
        %1048 = vmatpush1.msra.mxu0 0.0
        %1049 = vmatprep.subr.mxu0 0.0
        %1050 = vmatpush1.msra.mxu0 0.0
        %1051 = vmatprep.subr.mxu0 0.0
        %1052 = vmatpush1.msra.mxu0 0.0
        %1053 = vmatprep.subr.mxu0 0.0
        %1054 = vmatpush1.msra.mxu0 0.0
        %1055 = vmatprep.subr.mxu0 0.0
        %1056 = vmatpush1.msra.mxu0 0.0
        %1057 = vmatprep.subr.mxu0 0.0
        %1058 = vmatpush1.msra.mxu0 0.0
        %1059 = vmatprep.subr.mxu0 0.0
        %1060 = vmatpush1.msra.mxu0 0.0
        %1061 = vmatprep.subr.mxu0 0.0
        %1062 = vmatpush1.msra.mxu0 0.0
        %1063 = vmatprep.mubr.f32.mxu0 0.0
        %1064 = vmatmul.mubr.f32.gmra.mrb[0].mxu0 %v991
        %v1065 = vpop.f32.mrb[0].mxu0
        %v1066 = vadd.f32 %v977, %v1065
        %v1067 = vpop.f32.mrb[0].mxu0
        %1068 = vmatprep.mubr.f32.mxu0 0.0
        %1069 = vmatmul.mubr.f32.gmra.mrb[0].mxu0 %v994
        %v1070 = vpop.f32.mrb[0].mxu0
        %v1071 = vadd.f32 %v982, %v1070
        %v1072 = vpop.f32.mrb[0].mxu0
        %1073 = vmatprep.mubr.f32.mxu0 0.0
        %1074 = vmatmul.mubr.f32.gmra.mrb[0].mxu0 %v997
        %v1075 = vpop.f32.mrb[0].mxu0
        %v1076 = vadd.f32 %v987, %v1075
        %v1077 = vpop.f32.mrb[0].mxu0
        %1078 = vdwg.mxu0
        %v1079 = vmax.f32 %v1066, 0.0
        %v1080 = vmax.f32 %v1071, 0.0
        %v1081 = vmax.f32 %v1076, 0.0
        %v1082 = vlaneseq
        %v1083 = vand.u32 %v1082, 127
        %v1084 = vld [vmem:[%s7] sm:$0xff]
        %v1085 = vld [vmem:[%s7 + $0x8] sm:$0xff]
        %v1086 = vld [vmem:[%s8] sm:$0xff]
        %v1087 = vld [vmem:[%s8 + $0x8] sm:$0xff]
        %v1088 = vld [vmem:[%s9] sm:$0xff]
        %v1089 = vld [vmem:[%s9 + $0x8] sm:$0xff]
        %1091 = vset.pattern.permute.xlu0 0
        %1092 = vperm.xlu0 %1091, %v1088
        %v1093 = vpop.permute.xlu0 %1092
        %1096 = vset.pattern.permute.xlu0 0
        %1097 = vperm.xlu0 %1096, %v1089
        %v1098 = vpop.permute.xlu0 %1097
        %v1101 = vsel %vm959, %v1084, 0
        %v1104 = vsel %vm959, %v1085, 0
        %1106 = vmatprep.subr.mxu0 0.0
        %1107 = vmatpush1.msra.mxu0 %v1079
        %1108 = vmatprep.subr.mxu0 0.0
        %1109 = vmatpush1.msra.mxu0 %v1080
        %1110 = vmatprep.subr.mxu0 0.0
        %1111 = vmatpush1.msra.mxu0 %v1081
        %1112 = vmatprep.subr.mxu0 0.0
        %1113 = vmatpush1.msra.mxu0 0.0
        %1114 = vmatprep.subr.mxu0 0.0
        %1115 = vmatpush1.msra.mxu0 0.0
        %1116 = vmatprep.subr.mxu0 0.0
        %1117 = vmatpush1.msra.mxu0 0.0
        %1118 = vmatprep.subr.mxu0 0.0
        %1119 = vmatpush1.msra.mxu0 0.0
        %1120 = vmatprep.subr.mxu0 0.0
        %1121 = vmatpush1.msra.mxu0 0.0
        %1122 = vmatprep.subr.mxu0 0.0
        %1123 = vmatpush1.msra.mxu0 0.0
        %1124 = vmatprep.subr.mxu0 0.0
        %1125 = vmatpush1.msra.mxu0 0.0
        %1126 = vmatprep.subr.mxu0 0.0
        %1127 = vmatpush1.msra.mxu0 0.0
        %1128 = vmatprep.subr.mxu0 0.0
        %1129 = vmatpush1.msra.mxu0 0.0
        %1130 = vmatprep.subr.mxu0 0.0
        %1131 = vmatpush1.msra.mxu0 0.0
        %1132 = vmatprep.subr.mxu0 0.0
        %1133 = vmatpush1.msra.mxu0 0.0
        %1134 = vmatprep.subr.mxu0 0.0
        %1135 = vmatpush1.msra.mxu0 0.0
        %1136 = vmatprep.subr.mxu0 0.0
        %1137 = vmatpush1.msra.mxu0 0.0
        %1138 = vmatprep.subr.mxu0 0.0
        %1139 = vmatpush1.msra.mxu0 0.0
        %1140 = vmatprep.subr.mxu0 0.0
        %1141 = vmatpush1.msra.mxu0 0.0
        %1142 = vmatprep.subr.mxu0 0.0
        %1143 = vmatpush1.msra.mxu0 0.0
        %1144 = vmatprep.subr.mxu0 0.0
        %1145 = vmatpush1.msra.mxu0 0.0
        %1146 = vmatprep.subr.mxu0 0.0
        %1147 = vmatpush1.msra.mxu0 0.0
        %1148 = vmatprep.subr.mxu0 0.0
        %1149 = vmatpush1.msra.mxu0 0.0
        %1150 = vmatprep.subr.mxu0 0.0
        %1151 = vmatpush1.msra.mxu0 0.0
        %1152 = vmatprep.subr.mxu0 0.0
        %1153 = vmatpush1.msra.mxu0 0.0
        %1154 = vmatprep.subr.mxu0 0.0
        %1155 = vmatpush1.msra.mxu0 0.0
        %1156 = vmatprep.subr.mxu0 0.0
        %1157 = vmatpush1.msra.mxu0 0.0
        %1158 = vmatprep.subr.mxu0 0.0
        %1159 = vmatpush1.msra.mxu0 0.0
        %1160 = vmatprep.subr.mxu0 0.0
        %1161 = vmatpush1.msra.mxu0 0.0
        %1162 = vmatprep.subr.mxu0 0.0
        %1163 = vmatpush1.msra.mxu0 0.0
        %1164 = vmatprep.subr.mxu0 0.0
        %1165 = vmatpush1.msra.mxu0 0.0
        %1166 = vmatprep.subr.mxu0 0.0
        %1167 = vmatpush1.msra.mxu0 0.0
        %1168 = vmatprep.subr.mxu0 0.0
        %1169 = vmatpush1.msra.mxu0 0.0
        %1170 = vmatprep.mubr.f32.mxu0 0.0
        %1171 = vmatmul.mubr.f32.gmra.mrb[0].mxu0 %v1101
        %v1172 = vpop.f32.mrb[0].mxu0
        %v1173 = vadd.f32 %v1093, %v1172
        %v1174 = vpop.f32.mrb[0].mxu0
        %1175 = vmatprep.mubr.f32.mxu0 0.0
        %1176 = vmatmul.mubr.f32.gmra.mrb[0].mxu0 %v1104
        %v1177 = vpop.f32.mrb[0].mxu0
        %v1178 = vadd.f32 %v1098, %v1177
        %v1179 = vpop.f32.mrb[0].mxu0
        %1180 = vdwg.mxu0
        %v1182 = vsel %vm959, %v1086, 0
        %v1185 = vsel %vm959, %v1087, 0
        %1187 = vmatprep.subr.mxu0 0.0
        %1188 = vmatpush1.msra.mxu0 %v1079
        %1189 = vmatprep.subr.mxu0 0.0
        %1190 = vmatpush1.msra.mxu0 %v1080
        %1191 = vmatprep.subr.mxu0 0.0
        %1192 = vmatpush1.msra.mxu0 %v1081
        %1193 = vmatprep.subr.mxu0 0.0
        %1194 = vmatpush1.msra.mxu0 0.0
        %1195 = vmatprep.subr.mxu0 0.0
        %1196 = vmatpush1.msra.mxu0 0.0
        %1197 = vmatprep.subr.mxu0 0.0
        %1198 = vmatpush1.msra.mxu0 0.0
        %1199 = vmatprep.subr.mxu0 0.0
        %1200 = vmatpush1.msra.mxu0 0.0
        %1201 = vmatprep.subr.mxu0 0.0
        %1202 = vmatpush1.msra.mxu0 0.0
        %1203 = vmatprep.subr.mxu0 0.0
        %1204 = vmatpush1.msra.mxu0 0.0
        %1205 = vmatprep.subr.mxu0 0.0
        %1206 = vmatpush1.msra.mxu0 0.0
        %1207 = vmatprep.subr.mxu0 0.0
        %1208 = vmatpush1.msra.mxu0 0.0
        %1209 = vmatprep.subr.mxu0 0.0
        %1210 = vmatpush1.msra.mxu0 0.0
        %1211 = vmatprep.subr.mxu0 0.0
        %1212 = vmatpush1.msra.mxu0 0.0
        %1213 = vmatprep.subr.mxu0 0.0
        %1214 = vmatpush1.msra.mxu0 0.0
        %1215 = vmatprep.subr.mxu0 0.0
        %1216 = vmatpush1.msra.mxu0 0.0
        %1217 = vmatprep.subr.mxu0 0.0
        %1218 = vmatpush1.msra.mxu0 0.0
        %1219 = vmatprep.subr.mxu0 0.0
        %1220 = vmatpush1.msra.mxu0 0.0
        %1221 = vmatprep.subr.mxu0 0.0
        %1222 = vmatpush1.msra.mxu0 0.0
        %1223 = vmatprep.subr.mxu0 0.0
        %1224 = vmatpush1.msra.mxu0 0.0
        %1225 = vmatprep.subr.mxu0 0.0
        %1226 = vmatpush1.msra.mxu0 0.0
        %1227 = vmatprep.subr.mxu0 0.0
        %1228 = vmatpush1.msra.mxu0 0.0
        %1229 = vmatprep.subr.mxu0 0.0
        %1230 = vmatpush1.msra.mxu0 0.0
        %1231 = vmatprep.subr.mxu0 0.0
        %1232 = vmatpush1.msra.mxu0 0.0
        %1233 = vmatprep.subr.mxu0 0.0
        %1234 = vmatpush1.msra.mxu0 0.0
        %1235 = vmatprep.subr.mxu0 0.0
        %1236 = vmatpush1.msra.mxu0 0.0
        %1237 = vmatprep.subr.mxu0 0.0
        %1238 = vmatpush1.msra.mxu0 0.0
        %1239 = vmatprep.subr.mxu0 0.0
        %1240 = vmatpush1.msra.mxu0 0.0
        %1241 = vmatprep.subr.mxu0 0.0
        %1242 = vmatpush1.msra.mxu0 0.0
        %1243 = vmatprep.subr.mxu0 0.0
        %1244 = vmatpush1.msra.mxu0 0.0
        %1245 = vmatprep.subr.mxu0 0.0
        %1246 = vmatpush1.msra.mxu0 0.0
        %1247 = vmatprep.subr.mxu0 0.0
        %1248 = vmatpush1.msra.mxu0 0.0
        %1249 = vmatprep.subr.mxu0 0.0
        %1250 = vmatpush1.msra.mxu0 0.0
        %1251 = vmatprep.mubr.f32.mxu0 0.0
        %1252 = vmatmul.mubr.f32.gmra.mrb[0].mxu0 %v1182
        %v1253 = vpop.f32.mrb[0].mxu0
        %v1254 = vadd.f32 %v1093, %v1253
        %v1255 = vpop.f32.mrb[0].mxu0
        %1256 = vmatprep.mubr.f32.mxu0 0.0
        %1257 = vmatmul.mubr.f32.gmra.mrb[0].mxu0 %v1185
        %v1258 = vpop.f32.mrb[0].mxu0
        %v1259 = vadd.f32 %v1098, %v1258
        %v1260 = vpop.f32.mrb[0].mxu0
        %1261 = vdwg.mxu0
        %v1262 = vand.u32 %v1083, 3
        %vm1263 = vcmp.eq.s32.totalorder %v1262, 0
        %v1264 = vsel %vm1263, 1, 0
        %v1265 = vcvt.s32.f32 %v1264
        %v1266 = vmul.f32 %v1265, %v1173
        %v1267 = vmul.f32 %v1265, %v1178
        %v1268 = vmul.f32 %v1265, %v1254
        %v1269 = vmul.f32 %v1265, %v1259
        %1272 = vrot.lane.b32.xlu0 %v1268, 2
        %v1273 = vpop.permute.xlu0 %1272
        %1274 = vrot.lane.b32.xlu0 %v1269, 2
        %v1275 = vpop.permute.xlu0 %1274
        %v1278 = vsel %vm660, 0.0, %v1273
        %v1279 = vsel %vm660, 0.0, %v1275
        %v1280 = vadd.f32 %v1266, %v1278
        %v1281 = vadd.f32 %v1267, %v1279
        %v1282 = vld [vmem:[%s10] sm:$0xff]
        %v1283 = vld [vmem:[%s10 + $0x8] sm:$0xff]
        %v1284 = vld [vmem:[%s11] sm:$0xff]
        %v1285 = vld [vmem:[%s11 + $0x8] sm:$0xff]
        %v1286 = vld [vmem:[%s12] sm:$0xff]
        %v1287 = vld [vmem:[%s12 + $0x8] sm:$0xff]
        %1290 = vrot.lane.b32.xlu0 %v1280, 4
        %v1291 = vpop.permute.xlu0 %1290
        %1292 = vrot.lane.b32.xlu0 %v1281, 4
        %v1293 = vpop.permute.xlu0 %1292
        %v1296 = vsel %vm782, 0.0, %v1291
        %v1297 = vsel %vm782, 0.0, %v1293
        %1298 = vst.msk [vmem:[#allocation2] sm:$0xff] %vm662, %v1296
        %1299 = vst.msk [vmem:[#allocation2 + $0x8] sm:$0xff] %vm662, %v1297
        %1300 = vrot.lane.b32.xlu0 %v1280, 2
        %v1301 = vpop.permute.xlu0 %1300
        %1302 = vrot.lane.b32.xlu0 %v1281, 2
        %v1303 = vpop.permute.xlu0 %1302
        %v1306 = vsel %vm660, 0.0, %v1301
        %v1307 = vsel %vm660, 0.0, %v1303
        %1308 = vst.msk [vmem:[#allocation2 + $0x10] sm:$0xff] %vm662, %v1306
        %1309 = vst.msk [vmem:[#allocation2 + $0x18] sm:$0xff] %vm662, %v1307
        %1310 = vst.msk [vmem:[#allocation2 + $0x20] sm:$0xff] %vm662, %v1280
        %1311 = vst.msk [vmem:[#allocation2 + $0x28] sm:$0xff] %vm662, %v1281
        %1312 = vrot.lane.b32.xlu0 %v1280, 126
        %v1313 = vpop.permute.xlu0 %1312
        %1314 = vrot.lane.b32.xlu0 %v1281, 126
        %v1315 = vpop.permute.xlu0 %1314
        %v1318 = vsel %vm680, %v1313, 0.0
        %v1319 = vsel %vm680, %v1315, 0.0
        %1320 = vst.msk [vmem:[#allocation2 + $0x30] sm:$0xff] %vm662, %v1318
        %1321 = vst.msk [vmem:[#allocation2 + $0x38] sm:$0xff] %vm662, %v1319
        %1322 = vrot.lane.b32.xlu0 %v1280, 124
        %v1323 = vpop.permute.xlu0 %1322
        %1324 = vrot.lane.b32.xlu0 %v1281, 124
        %v1325 = vpop.permute.xlu0 %1324
        %v1328 = vsel %vm799, %v1323, 0.0
        %v1329 = vsel %vm799, %v1325, 0.0
        %1330 = vst.msk [vmem:[#allocation2 + $0x40] sm:$0xff] %vm662, %v1328
        %1331 = vst.msk [vmem:[#allocation2 + $0x48] sm:$0xff] %vm662, %v1329
        %v1332 = vld [vmem:[#allocation2] sm:$0xff]
        %v1333 = vld [vmem:[#allocation2 + $0x8] sm:$0xff]
        %v1334 = vld [vmem:[#allocation2 + $0x10] sm:$0xff]
        %v1335 = vld [vmem:[#allocation2 + $0x18] sm:$0xff]
        %v1336 = vld [vmem:[#allocation2 + $0x20] sm:$0xff]
        %v1337 = vld [vmem:[#allocation2 + $0x28] sm:$0xff]
        %v1338 = vld [vmem:[#allocation2 + $0x30] sm:$0xff]
        %v1339 = vld [vmem:[#allocation2 + $0x38] sm:$0xff]
        %v1340 = vld [vmem:[#allocation2 + $0x40] sm:$0xff]
        %v1341 = vld [vmem:[#allocation2 + $0x48] sm:$0xff]
        %1342 = vrot.lane.b32.xlu0 %v898, 4
        %v1343 = vpop.permute.xlu0 %1342
        %1344 = vrot.lane.b32.xlu0 %v899, 4
        %v1345 = vpop.permute.xlu0 %1344
        %v1348 = vsel %vm782, 0.0, %v1343
        %v1349 = vsel %vm782, 0.0, %v1345
        %1350 = vst.msk [vmem:[#allocation2] sm:$0xff] %vm662, %v1348
        %1351 = vst.msk [vmem:[#allocation2 + $0x8] sm:$0xff] %vm662, %v1349
        %1352 = vrot.lane.b32.xlu0 %v898, 2
        %v1353 = vpop.permute.xlu0 %1352
        %1354 = vrot.lane.b32.xlu0 %v899, 2
        %v1355 = vpop.permute.xlu0 %1354
        %v1358 = vsel %vm660, 0.0, %v1353
        %v1359 = vsel %vm660, 0.0, %v1355
        %1360 = vst.msk [vmem:[#allocation2 + $0x10] sm:$0xff] %vm662, %v1358
        %1361 = vst.msk [vmem:[#allocation2 + $0x18] sm:$0xff] %vm662, %v1359
        %1362 = vst.msk [vmem:[#allocation2 + $0x20] sm:$0xff] %vm662, %v898
        %1363 = vst.msk [vmem:[#allocation2 + $0x28] sm:$0xff] %vm662, %v899
        %1364 = vst.msk [vmem:[#allocation2 + $0x30] sm:$0xff] %vm662, %v908
        %1365 = vst.msk [vmem:[#allocation2 + $0x38] sm:$0xff] %vm662, %v909
        %1366 = vrot.lane.b32.xlu0 %v898, 124
        %v1367 = vpop.permute.xlu0 %1366
        %1368 = vrot.lane.b32.xlu0 %v899, 124
        %v1369 = vpop.permute.xlu0 %1368
        %v1372 = vsel %vm799, %v1367, 0.0
        %v1373 = vsel %vm799, %v1369, 0.0
        %1374 = vst.msk [vmem:[#allocation2 + $0x40] sm:$0xff] %vm662, %v1372
        %1375 = vst.msk [vmem:[#allocation2 + $0x48] sm:$0xff] %vm662, %v1373
        %v1376 = vld [vmem:[#allocation2] sm:$0xff]
        %v1377 = vld [vmem:[#allocation2 + $0x8] sm:$0xff]
        %v1378 = vld [vmem:[#allocation2 + $0x10] sm:$0xff]
        %v1379 = vld [vmem:[#allocation2 + $0x18] sm:$0xff]
        %v1380 = vld [vmem:[#allocation2 + $0x20] sm:$0xff]
        %v1381 = vld [vmem:[#allocation2 + $0x28] sm:$0xff]
        %v1382 = vld [vmem:[#allocation2 + $0x30] sm:$0xff]
        %v1383 = vld [vmem:[#allocation2 + $0x38] sm:$0xff]
        %v1384 = vld [vmem:[#allocation2 + $0x40] sm:$0xff]
        %v1385 = vld [vmem:[#allocation2 + $0x48] sm:$0xff]
        %v1387 = vsel %vm989, %v1284, 0
        %v1390 = vsel %vm989, %v1285, 0
        %1392 = vmatprep.subr.mxu0 0.0
        %1393 = vmatpush1.msra.mxu0 %v1376
        %1394 = vmatprep.subr.mxu0 0.0
        %1395 = vmatpush1.msra.mxu0 %v1377
        %1396 = vmatprep.subr.mxu0 0.0
        %1397 = vmatpush1.msra.mxu0 %v1378
        %1398 = vmatprep.subr.mxu0 0.0
        %1399 = vmatpush1.msra.mxu0 %v1379
        %1400 = vmatprep.subr.mxu0 0.0
        %1401 = vmatpush1.msra.mxu0 %v1380
        %1402 = vmatprep.subr.mxu0 0.0
        %1403 = vmatpush1.msra.mxu0 %v1381
        %1404 = vmatprep.subr.mxu0 0.0
        %1405 = vmatpush1.msra.mxu0 %v1382
        %1406 = vmatprep.subr.mxu0 0.0
        %1407 = vmatpush1.msra.mxu0 %v1383
        %1408 = vmatprep.subr.mxu0 0.0
        %1409 = vmatpush1.msra.mxu0 %v1384
        %1410 = vmatprep.subr.mxu0 0.0
        %1411 = vmatpush1.msra.mxu0 %v1385
        %1412 = vmatprep.subr.mxu0 0.0
        %1413 = vmatpush1.msra.mxu0 0.0
        %1414 = vmatprep.subr.mxu0 0.0
        %1415 = vmatpush1.msra.mxu0 0.0
        %1416 = vmatprep.subr.mxu0 0.0
        %1417 = vmatpush1.msra.mxu0 0.0
        %1418 = vmatprep.subr.mxu0 0.0
        %1419 = vmatpush1.msra.mxu0 0.0
        %1420 = vmatprep.subr.mxu0 0.0
        %1421 = vmatpush1.msra.mxu0 0.0
        %1422 = vmatprep.subr.mxu0 0.0
        %1423 = vmatpush1.msra.mxu0 0.0
        %1424 = vmatprep.subr.mxu0 0.0
        %1425 = vmatpush1.msra.mxu0 0.0
        %1426 = vmatprep.subr.mxu0 0.0
        %1427 = vmatpush1.msra.mxu0 0.0
        %1428 = vmatprep.subr.mxu0 0.0
        %1429 = vmatpush1.msra.mxu0 0.0
        %1430 = vmatprep.subr.mxu0 0.0
        %1431 = vmatpush1.msra.mxu0 0.0
        %1432 = vmatprep.subr.mxu0 0.0
        %1433 = vmatpush1.msra.mxu0 0.0
        %1434 = vmatprep.subr.mxu0 0.0
        %1435 = vmatpush1.msra.mxu0 0.0
        %1436 = vmatprep.subr.mxu0 0.0
        %1437 = vmatpush1.msra.mxu0 0.0
        %1438 = vmatprep.subr.mxu0 0.0
        %1439 = vmatpush1.msra.mxu0 0.0
        %1440 = vmatprep.subr.mxu0 0.0
        %1441 = vmatpush1.msra.mxu0 0.0
        %1442 = vmatprep.subr.mxu0 0.0
        %1443 = vmatpush1.msra.mxu0 0.0
        %1444 = vmatprep.subr.mxu0 0.0
        %1445 = vmatpush1.msra.mxu0 0.0
        %1446 = vmatprep.subr.mxu0 0.0
        %1447 = vmatpush1.msra.mxu0 0.0
        %1448 = vmatprep.subr.mxu0 0.0
        %1449 = vmatpush1.msra.mxu0 0.0
        %1450 = vmatprep.subr.mxu0 0.0
        %1451 = vmatpush1.msra.mxu0 0.0
        %1452 = vmatprep.subr.mxu0 0.0
        %1453 = vmatpush1.msra.mxu0 0.0
        %1454 = vmatprep.subr.mxu0 0.0
        %1455 = vmatpush1.msra.mxu0 0.0
        %1456 = vmatprep.mubr.f32.mxu0 0.0
        %1457 = vmatmul.mubr.f32.gmra.mrb[0].mxu0 %v1387
        %v1458 = vpop.f32.mrb[0].mxu0
        %v1459 = vadd.f32 0.0, %v1458
        %v1460 = vpop.f32.mrb[0].mxu0
        %1461 = vmatprep.mubr.f32.mxu0 0.0
        %1462 = vmatmul.mubr.f32.gmra.mrb[0].mxu0 %v1390
        %v1463 = vpop.f32.mrb[0].mxu0
        %v1464 = vadd.f32 0.0, %v1463
        %v1465 = vpop.f32.mrb[0].mxu0
        %1466 = vdwg.mxu0
        %v1468 = vsel %vm989, %v1282, 0
        %v1471 = vsel %vm989, %v1283, 0
        %1473 = vmatprep.subr.mxu0 0.0
        %1474 = vmatpush1.msra.mxu0 %v1332
        %1475 = vmatprep.subr.mxu0 0.0
        %1476 = vmatpush1.msra.mxu0 %v1333
        %1477 = vmatprep.subr.mxu0 0.0
        %1478 = vmatpush1.msra.mxu0 %v1334
        %1479 = vmatprep.subr.mxu0 0.0
        %1480 = vmatpush1.msra.mxu0 %v1335
        %1481 = vmatprep.subr.mxu0 0.0
        %1482 = vmatpush1.msra.mxu0 %v1336
        %1483 = vmatprep.subr.mxu0 0.0
        %1484 = vmatpush1.msra.mxu0 %v1337
        %1485 = vmatprep.subr.mxu0 0.0
        %1486 = vmatpush1.msra.mxu0 %v1338
        %1487 = vmatprep.subr.mxu0 0.0
        %1488 = vmatpush1.msra.mxu0 %v1339
        %1489 = vmatprep.subr.mxu0 0.0
        %1490 = vmatpush1.msra.mxu0 %v1340
        %1491 = vmatprep.subr.mxu0 0.0
        %1492 = vmatpush1.msra.mxu0 %v1341
        %1493 = vmatprep.subr.mxu0 0.0
        %1494 = vmatpush1.msra.mxu0 0.0
        %1495 = vmatprep.subr.mxu0 0.0
        %1496 = vmatpush1.msra.mxu0 0.0
        %1497 = vmatprep.subr.mxu0 0.0
        %1498 = vmatpush1.msra.mxu0 0.0
        %1499 = vmatprep.subr.mxu0 0.0
        %1500 = vmatpush1.msra.mxu0 0.0
        %1501 = vmatprep.subr.mxu0 0.0
        %1502 = vmatpush1.msra.mxu0 0.0
        %1503 = vmatprep.subr.mxu0 0.0
        %1504 = vmatpush1.msra.mxu0 0.0
        %1505 = vmatprep.subr.mxu0 0.0
        %1506 = vmatpush1.msra.mxu0 0.0
        %1507 = vmatprep.subr.mxu0 0.0
        %1508 = vmatpush1.msra.mxu0 0.0
        %1509 = vmatprep.subr.mxu0 0.0
        %1510 = vmatpush1.msra.mxu0 0.0
        %1511 = vmatprep.subr.mxu0 0.0
        %1512 = vmatpush1.msra.mxu0 0.0
        %1513 = vmatprep.subr.mxu0 0.0
        %1514 = vmatpush1.msra.mxu0 0.0
        %1515 = vmatprep.subr.mxu0 0.0
        %1516 = vmatpush1.msra.mxu0 0.0
        %1517 = vmatprep.subr.mxu0 0.0
        %1518 = vmatpush1.msra.mxu0 0.0
        %1519 = vmatprep.subr.mxu0 0.0
        %1520 = vmatpush1.msra.mxu0 0.0
        %1521 = vmatprep.subr.mxu0 0.0
        %1522 = vmatpush1.msra.mxu0 0.0
        %1523 = vmatprep.subr.mxu0 0.0
        %1524 = vmatpush1.msra.mxu0 0.0
        %1525 = vmatprep.subr.mxu0 0.0
        %1526 = vmatpush1.msra.mxu0 0.0
        %1527 = vmatprep.subr.mxu0 0.0
        %1528 = vmatpush1.msra.mxu0 0.0
        %1529 = vmatprep.subr.mxu0 0.0
        %1530 = vmatpush1.msra.mxu0 0.0
        %1531 = vmatprep.subr.mxu0 0.0
        %1532 = vmatpush1.msra.mxu0 0.0
        %1533 = vmatprep.subr.mxu0 0.0
        %1534 = vmatpush1.msra.mxu0 0.0
        %1535 = vmatprep.subr.mxu0 0.0
        %1536 = vmatpush1.msra.mxu0 0.0
        %1537 = vmatprep.mubr.f32.mxu0 0.0
        %1538 = vmatmul.mubr.f32.gmra.mrb[0].mxu0 %v1468
        %v1539 = vpop.f32.mrb[0].mxu0
        %v1540 = vadd.f32 %v1459, %v1539
        %v1541 = vpop.f32.mrb[0].mxu0
        %1542 = vmatprep.mubr.f32.mxu0 0.0
        %1543 = vmatmul.mubr.f32.gmra.mrb[0].mxu0 %v1471
        %v1544 = vpop.f32.mrb[0].mxu0
        %v1545 = vadd.f32 %v1464, %v1544
        %v1546 = vpop.f32.mrb[0].mxu0
        %1547 = vdwg.mxu0
        %1549 = vset.pattern.permute.xlu0 0
        %1550 = vperm.xlu0 %1549, %v1286
        %v1551 = vpop.permute.xlu0 %1550
        %1554 = vset.pattern.permute.xlu0 0
        %1555 = vperm.xlu0 %1554, %v1287
        %v1556 = vpop.permute.xlu0 %1555
        %v1558 = vadd.f32 %v1540, %v1551
        %v1559 = vadd.f32 %v1545, %v1556
        %v1560 = vmax.f32 %v1558, 0.0
        %v1561 = vmax.f32 %v1559, 0.0
        %v1562 = vld [vmem:[%s13] sm:$0xff]
        %v1563 = vld [vmem:[%s14] sm:$0xff]
        %v1564 = vld [vmem:[%s15] sm:$0xff]
        %1566 = vset.pattern.permute.xlu0 0
        %1567 = vperm.xlu0 %1566, %v1564
        %v1568 = vpop.permute.xlu0 %1567
        %vm1570 = vcmask 130048
        %v1572 = vsel %vm1570, %v1562, 0
        %1574 = vmatprep.subr.mxu0 0.0
        %1575 = vmatpush1.msra.mxu0 %v1560
        %1576 = vmatprep.subr.mxu0 0.0
        %1577 = vmatpush1.msra.mxu0 %v1561
        %1578 = vmatprep.subr.mxu0 0.0
        %1579 = vmatpush1.msra.mxu0 0.0
        %1580 = vmatprep.subr.mxu0 0.0
        %1581 = vmatpush1.msra.mxu0 0.0
        %1582 = vmatprep.subr.mxu0 0.0
        %1583 = vmatpush1.msra.mxu0 0.0
        %1584 = vmatprep.subr.mxu0 0.0
        %1585 = vmatpush1.msra.mxu0 0.0
        %1586 = vmatprep.subr.mxu0 0.0
        %1587 = vmatpush1.msra.mxu0 0.0
        %1588 = vmatprep.subr.mxu0 0.0
        %1589 = vmatpush1.msra.mxu0 0.0
        %1590 = vmatprep.subr.mxu0 0.0
        %1591 = vmatpush1.msra.mxu0 0.0
        %1592 = vmatprep.subr.mxu0 0.0
        %1593 = vmatpush1.msra.mxu0 0.0
        %1594 = vmatprep.subr.mxu0 0.0
        %1595 = vmatpush1.msra.mxu0 0.0
        %1596 = vmatprep.subr.mxu0 0.0
        %1597 = vmatpush1.msra.mxu0 0.0
        %1598 = vmatprep.subr.mxu0 0.0
        %1599 = vmatpush1.msra.mxu0 0.0
        %1600 = vmatprep.subr.mxu0 0.0
        %1601 = vmatpush1.msra.mxu0 0.0
        %1602 = vmatprep.subr.mxu0 0.0
        %1603 = vmatpush1.msra.mxu0 0.0
        %1604 = vmatprep.subr.mxu0 0.0
        %1605 = vmatpush1.msra.mxu0 0.0
        %1606 = vmatprep.subr.mxu0 0.0
        %1607 = vmatpush1.msra.mxu0 0.0
        %1608 = vmatprep.subr.mxu0 0.0
        %1609 = vmatpush1.msra.mxu0 0.0
        %1610 = vmatprep.subr.mxu0 0.0
        %1611 = vmatpush1.msra.mxu0 0.0
        %1612 = vmatprep.subr.mxu0 0.0
        %1613 = vmatpush1.msra.mxu0 0.0
        %1614 = vmatprep.subr.mxu0 0.0
        %1615 = vmatpush1.msra.mxu0 0.0
        %1616 = vmatprep.subr.mxu0 0.0
        %1617 = vmatpush1.msra.mxu0 0.0
        %1618 = vmatprep.subr.mxu0 0.0
        %1619 = vmatpush1.msra.mxu0 0.0
        %1620 = vmatprep.subr.mxu0 0.0
        %1621 = vmatpush1.msra.mxu0 0.0
        %1622 = vmatprep.subr.mxu0 0.0
        %1623 = vmatpush1.msra.mxu0 0.0
        %1624 = vmatprep.subr.mxu0 0.0
        %1625 = vmatpush1.msra.mxu0 0.0
        %1626 = vmatprep.subr.mxu0 0.0
        %1627 = vmatpush1.msra.mxu0 0.0
        %1628 = vmatprep.subr.mxu0 0.0
        %1629 = vmatpush1.msra.mxu0 0.0
        %1630 = vmatprep.subr.mxu0 0.0
        %1631 = vmatpush1.msra.mxu0 0.0
        %1632 = vmatprep.subr.mxu0 0.0
        %1633 = vmatpush1.msra.mxu0 0.0
        %1634 = vmatprep.subr.mxu0 0.0
        %1635 = vmatpush1.msra.mxu0 0.0
        %1636 = vmatprep.subr.mxu0 0.0
        %1637 = vmatpush1.msra.mxu0 0.0
        %1638 = vmatprep.mubr.f32.mxu0 0.0
        %1639 = vmatmul.mubr.f32.gmra.mrb[0].mxu0 %v1572
        %v1640 = vpop.f32.mrb[0].mxu0
        %v1641 = vadd.f32 %v1568, %v1640
        %v1642 = vpop.f32.mrb[0].mxu0
        %1643 = vdwg.mxu0
        %v1645 = vsel %vm1570, %v1563, 0
        %1647 = vmatprep.subr.mxu0 0.0
        %1648 = vmatpush1.msra.mxu0 %v1560
        %1649 = vmatprep.subr.mxu0 0.0
        %1650 = vmatpush1.msra.mxu0 %v1561
        %1651 = vmatprep.subr.mxu0 0.0
        %1652 = vmatpush1.msra.mxu0 0.0
        %1653 = vmatprep.subr.mxu0 0.0
        %1654 = vmatpush1.msra.mxu0 0.0
        %1655 = vmatprep.subr.mxu0 0.0
        %1656 = vmatpush1.msra.mxu0 0.0
        %1657 = vmatprep.subr.mxu0 0.0
        %1658 = vmatpush1.msra.mxu0 0.0
        %1659 = vmatprep.subr.mxu0 0.0
        %1660 = vmatpush1.msra.mxu0 0.0
        %1661 = vmatprep.subr.mxu0 0.0
        %1662 = vmatpush1.msra.mxu0 0.0
        %1663 = vmatprep.subr.mxu0 0.0
        %1664 = vmatpush1.msra.mxu0 0.0
        %1665 = vmatprep.subr.mxu0 0.0
        %1666 = vmatpush1.msra.mxu0 0.0
        %1667 = vmatprep.subr.mxu0 0.0
        %1668 = vmatpush1.msra.mxu0 0.0
        %1669 = vmatprep.subr.mxu0 0.0
        %1670 = vmatpush1.msra.mxu0 0.0
        %1671 = vmatprep.subr.mxu0 0.0
        %1672 = vmatpush1.msra.mxu0 0.0
        %1673 = vmatprep.subr.mxu0 0.0
        %1674 = vmatpush1.msra.mxu0 0.0
        %1675 = vmatprep.subr.mxu0 0.0
        %1676 = vmatpush1.msra.mxu0 0.0
        %1677 = vmatprep.subr.mxu0 0.0
        %1678 = vmatpush1.msra.mxu0 0.0
        %1679 = vmatprep.subr.mxu0 0.0
        %1680 = vmatpush1.msra.mxu0 0.0
        %1681 = vmatprep.subr.mxu0 0.0
        %1682 = vmatpush1.msra.mxu0 0.0
        %1683 = vmatprep.subr.mxu0 0.0
        %1684 = vmatpush1.msra.mxu0 0.0
        %1685 = vmatprep.subr.mxu0 0.0
        %1686 = vmatpush1.msra.mxu0 0.0
        %1687 = vmatprep.subr.mxu0 0.0
        %1688 = vmatpush1.msra.mxu0 0.0
        %1689 = vmatprep.subr.mxu0 0.0
        %1690 = vmatpush1.msra.mxu0 0.0
        %1691 = vmatprep.subr.mxu0 0.0
        %1692 = vmatpush1.msra.mxu0 0.0
        %1693 = vmatprep.subr.mxu0 0.0
        %1694 = vmatpush1.msra.mxu0 0.0
        %1695 = vmatprep.subr.mxu0 0.0
        %1696 = vmatpush1.msra.mxu0 0.0
        %1697 = vmatprep.subr.mxu0 0.0
        %1698 = vmatpush1.msra.mxu0 0.0
        %1699 = vmatprep.subr.mxu0 0.0
        %1700 = vmatpush1.msra.mxu0 0.0
        %1701 = vmatprep.subr.mxu0 0.0
        %1702 = vmatpush1.msra.mxu0 0.0
        %1703 = vmatprep.subr.mxu0 0.0
        %1704 = vmatpush1.msra.mxu0 0.0
        %1705 = vmatprep.subr.mxu0 0.0
        %1706 = vmatpush1.msra.mxu0 0.0
        %1707 = vmatprep.subr.mxu0 0.0
        %1708 = vmatpush1.msra.mxu0 0.0
        %1709 = vmatprep.subr.mxu0 0.0
        %1710 = vmatpush1.msra.mxu0 0.0
        %1711 = vmatprep.mubr.f32.mxu0 0.0
        %1712 = vmatmul.mubr.f32.gmra.mrb[0].mxu0 %v1645
        %v1713 = vpop.f32.mrb[0].mxu0
        %v1714 = vadd.f32 %v1568, %v1713
        %v1715 = vpop.f32.mrb[0].mxu0
        %1716 = vdwg.mxu0
        %v1717 = vand.u32 %v1083, 1
        %vm1718 = vcmp.eq.s32.totalorder %v1717, 0
        %v1719 = vsel %vm1718, 1, 0
        %v1720 = vcvt.s32.f32 %v1719
        %v1721 = vmul.f32 %v1720, %v1641
        %v1722 = vmul.f32 %v1720, %v1714
        %1724 = vrot.lane.b32.xlu0 %v1722, 1
        %v1725 = vpop.permute.xlu0 %1724
        %v1727 = vsel %vm667, 0.0, %v1725
        %v1728 = vadd.f32 %v1721, %v1727
        %v1729 = vld [vmem:[%s16] sm:$0xff]
        %v1730 = vld [vmem:[%s17] sm:$0xff]
        %v1731 = vld [vmem:[%s18] sm:$0xff]
        %1733 = vrot.lane.b32.xlu0 %v1728, 2
        %v1734 = vpop.permute.xlu0 %1733
        %v1736 = vsel %vm660, 0.0, %v1734
        %1737 = vst.msk [vmem:[#allocation2] sm:$0xff] %vm662, %v1736
        %1738 = vrot.lane.b32.xlu0 %v1728, 1
        %v1739 = vpop.permute.xlu0 %1738
        %v1741 = vsel %vm667, 0.0, %v1739
        %1742 = vst.msk [vmem:[#allocation2 + $0x8] sm:$0xff] %vm662, %v1741
        %1743 = vst.msk [vmem:[#allocation2 + $0x10] sm:$0xff] %vm662, %v1728
        %1744 = vrot.lane.b32.xlu0 %v1728, 127
        %v1745 = vpop.permute.xlu0 %1744
        %v1747 = vsel %vm674, %v1745, 0.0
        %1748 = vst.msk [vmem:[#allocation2 + $0x18] sm:$0xff] %vm662, %v1747
        %1749 = vrot.lane.b32.xlu0 %v1728, 126
        %v1750 = vpop.permute.xlu0 %1749
        %v1752 = vsel %vm680, %v1750, 0.0
        %1753 = vst.msk [vmem:[#allocation2 + $0x20] sm:$0xff] %vm662, %v1752
        %v1754 = vld [vmem:[#allocation2] sm:$0xff]
        %v1755 = vld [vmem:[#allocation2 + $0x8] sm:$0xff]
        %v1756 = vld [vmem:[#allocation2 + $0x10] sm:$0xff]
        %v1757 = vld [vmem:[#allocation2 + $0x18] sm:$0xff]
        %v1758 = vld [vmem:[#allocation2 + $0x20] sm:$0xff]
        %1759 = vrot.lane.b32.xlu0 %v767, 2
        %v1760 = vpop.permute.xlu0 %1759
        %v1762 = vsel %vm660, 0.0, %v1760
        %1763 = vst.msk [vmem:[#allocation2] sm:$0xff] %vm662, %v1762
        %1764 = vrot.lane.b32.xlu0 %v767, 1
        %v1765 = vpop.permute.xlu0 %1764
        %v1767 = vsel %vm667, 0.0, %v1765
        %1768 = vst.msk [vmem:[#allocation2 + $0x8] sm:$0xff] %vm662, %v1767
        %1769 = vst.msk [vmem:[#allocation2 + $0x10] sm:$0xff] %vm662, %v767
        %1770 = vst.msk [vmem:[#allocation2 + $0x18] sm:$0xff] %vm662, %v772
        %1771 = vrot.lane.b32.xlu0 %v767, 126
        %v1772 = vpop.permute.xlu0 %1771
        %v1774 = vsel %vm680, %v1772, 0.0
        %1775 = vst.msk [vmem:[#allocation2 + $0x20] sm:$0xff] %vm662, %v1774
        %v1776 = vld [vmem:[#allocation2] sm:$0xff]
        %v1777 = vld [vmem:[#allocation2 + $0x8] sm:$0xff]
        %v1778 = vld [vmem:[#allocation2 + $0x10] sm:$0xff]
        %v1779 = vld [vmem:[#allocation2 + $0x18] sm:$0xff]
        %v1780 = vld [vmem:[#allocation2 + $0x20] sm:$0xff]
        %v1782 = vsel %vm693, %v1730, 0
        %1784 = vmatprep.subr.mxu0 0.0
        %1785 = vmatpush1.msra.mxu0 %v1776
        %1786 = vmatprep.subr.mxu0 0.0
        %1787 = vmatpush1.msra.mxu0 %v1777
        %1788 = vmatprep.subr.mxu0 0.0
        %1789 = vmatpush1.msra.mxu0 %v1778
        %1790 = vmatprep.subr.mxu0 0.0
        %1791 = vmatpush1.msra.mxu0 %v1779
        %1792 = vmatprep.subr.mxu0 0.0
        %1793 = vmatpush1.msra.mxu0 %v1780
        %1794 = vmatprep.subr.mxu0 0.0
        %1795 = vmatpush1.msra.mxu0 0.0
        %1796 = vmatprep.subr.mxu0 0.0
        %1797 = vmatpush1.msra.mxu0 0.0
        %1798 = vmatprep.subr.mxu0 0.0
        %1799 = vmatpush1.msra.mxu0 0.0
        %1800 = vmatprep.subr.mxu0 0.0
        %1801 = vmatpush1.msra.mxu0 0.0
        %1802 = vmatprep.subr.mxu0 0.0
        %1803 = vmatpush1.msra.mxu0 0.0
        %1804 = vmatprep.subr.mxu0 0.0
        %1805 = vmatpush1.msra.mxu0 0.0
        %1806 = vmatprep.subr.mxu0 0.0
        %1807 = vmatpush1.msra.mxu0 0.0
        %1808 = vmatprep.subr.mxu0 0.0
        %1809 = vmatpush1.msra.mxu0 0.0
        %1810 = vmatprep.subr.mxu0 0.0
        %1811 = vmatpush1.msra.mxu0 0.0
        %1812 = vmatprep.subr.mxu0 0.0
        %1813 = vmatpush1.msra.mxu0 0.0
        %1814 = vmatprep.subr.mxu0 0.0
        %1815 = vmatpush1.msra.mxu0 0.0
        %1816 = vmatprep.subr.mxu0 0.0
        %1817 = vmatpush1.msra.mxu0 0.0
        %1818 = vmatprep.subr.mxu0 0.0
        %1819 = vmatpush1.msra.mxu0 0.0
        %1820 = vmatprep.subr.mxu0 0.0
        %1821 = vmatpush1.msra.mxu0 0.0
        %1822 = vmatprep.subr.mxu0 0.0
        %1823 = vmatpush1.msra.mxu0 0.0
        %1824 = vmatprep.subr.mxu0 0.0
        %1825 = vmatpush1.msra.mxu0 0.0
        %1826 = vmatprep.subr.mxu0 0.0
        %1827 = vmatpush1.msra.mxu0 0.0
        %1828 = vmatprep.subr.mxu0 0.0
        %1829 = vmatpush1.msra.mxu0 0.0
        %1830 = vmatprep.subr.mxu0 0.0
        %1831 = vmatpush1.msra.mxu0 0.0
        %1832 = vmatprep.subr.mxu0 0.0
        %1833 = vmatpush1.msra.mxu0 0.0
        %1834 = vmatprep.subr.mxu0 0.0
        %1835 = vmatpush1.msra.mxu0 0.0
        %1836 = vmatprep.subr.mxu0 0.0
        %1837 = vmatpush1.msra.mxu0 0.0
        %1838 = vmatprep.subr.mxu0 0.0
        %1839 = vmatpush1.msra.mxu0 0.0
        %1840 = vmatprep.subr.mxu0 0.0
        %1841 = vmatpush1.msra.mxu0 0.0
        %1842 = vmatprep.subr.mxu0 0.0
        %1843 = vmatpush1.msra.mxu0 0.0
        %1844 = vmatprep.subr.mxu0 0.0
        %1845 = vmatpush1.msra.mxu0 0.0
        %1846 = vmatprep.subr.mxu0 0.0
        %1847 = vmatpush1.msra.mxu0 0.0
        %1848 = vmatprep.mubr.f32.mxu0 0.0
        %1849 = vmatmul.mubr.f32.gmra.mrb[0].mxu0 %v1782
        %v1850 = vpop.f32.mrb[0].mxu0
        %v1851 = vadd.f32 0.0, %v1850
        %v1852 = vpop.f32.mrb[0].mxu0
        %1853 = vdwg.mxu0
        %v1855 = vsel %vm693, %v1729, 0
        %1857 = vmatprep.subr.mxu0 0.0
        %1858 = vmatpush1.msra.mxu0 %v1754
        %1859 = vmatprep.subr.mxu0 0.0
        %1860 = vmatpush1.msra.mxu0 %v1755
        %1861 = vmatprep.subr.mxu0 0.0
        %1862 = vmatpush1.msra.mxu0 %v1756
        %1863 = vmatprep.subr.mxu0 0.0
        %1864 = vmatpush1.msra.mxu0 %v1757
        %1865 = vmatprep.subr.mxu0 0.0
        %1866 = vmatpush1.msra.mxu0 %v1758
        %1867 = vmatprep.subr.mxu0 0.0
        %1868 = vmatpush1.msra.mxu0 0.0
        %1869 = vmatprep.subr.mxu0 0.0
        %1870 = vmatpush1.msra.mxu0 0.0
        %1871 = vmatprep.subr.mxu0 0.0
        %1872 = vmatpush1.msra.mxu0 0.0
        %1873 = vmatprep.subr.mxu0 0.0
        %1874 = vmatpush1.msra.mxu0 0.0
        %1875 = vmatprep.subr.mxu0 0.0
        %1876 = vmatpush1.msra.mxu0 0.0
        %1877 = vmatprep.subr.mxu0 0.0
        %1878 = vmatpush1.msra.mxu0 0.0
        %1879 = vmatprep.subr.mxu0 0.0
        %1880 = vmatpush1.msra.mxu0 0.0
        %1881 = vmatprep.subr.mxu0 0.0
        %1882 = vmatpush1.msra.mxu0 0.0
        %1883 = vmatprep.subr.mxu0 0.0
        %1884 = vmatpush1.msra.mxu0 0.0
        %1885 = vmatprep.subr.mxu0 0.0
        %1886 = vmatpush1.msra.mxu0 0.0
        %1887 = vmatprep.subr.mxu0 0.0
        %1888 = vmatpush1.msra.mxu0 0.0
        %1889 = vmatprep.subr.mxu0 0.0
        %1890 = vmatpush1.msra.mxu0 0.0
        %1891 = vmatprep.subr.mxu0 0.0
        %1892 = vmatpush1.msra.mxu0 0.0
        %1893 = vmatprep.subr.mxu0 0.0
        %1894 = vmatpush1.msra.mxu0 0.0
        %1895 = vmatprep.subr.mxu0 0.0
        %1896 = vmatpush1.msra.mxu0 0.0
        %1897 = vmatprep.subr.mxu0 0.0
        %1898 = vmatpush1.msra.mxu0 0.0
        %1899 = vmatprep.subr.mxu0 0.0
        %1900 = vmatpush1.msra.mxu0 0.0
        %1901 = vmatprep.subr.mxu0 0.0
        %1902 = vmatpush1.msra.mxu0 0.0
        %1903 = vmatprep.subr.mxu0 0.0
        %1904 = vmatpush1.msra.mxu0 0.0
        %1905 = vmatprep.subr.mxu0 0.0
        %1906 = vmatpush1.msra.mxu0 0.0
        %1907 = vmatprep.subr.mxu0 0.0
        %1908 = vmatpush1.msra.mxu0 0.0
        %1909 = vmatprep.subr.mxu0 0.0
        %1910 = vmatpush1.msra.mxu0 0.0
        %1911 = vmatprep.subr.mxu0 0.0
        %1912 = vmatpush1.msra.mxu0 0.0
        %1913 = vmatprep.subr.mxu0 0.0
        %1914 = vmatpush1.msra.mxu0 0.0
        %1915 = vmatprep.subr.mxu0 0.0
        %1916 = vmatpush1.msra.mxu0 0.0
        %1917 = vmatprep.subr.mxu0 0.0
        %1918 = vmatpush1.msra.mxu0 0.0
        %1919 = vmatprep.subr.mxu0 0.0
        %1920 = vmatpush1.msra.mxu0 0.0
        %1921 = vmatprep.mubr.f32.mxu0 0.0
        %1922 = vmatmul.mubr.f32.gmra.mrb[0].mxu0 %v1855
        %v1923 = vpop.f32.mrb[0].mxu0
        %v1924 = vadd.f32 %v1851, %v1923
        %v1925 = vpop.f32.mrb[0].mxu0
        %1926 = vdwg.mxu0
        %1928 = vset.pattern.permute.xlu0 0
        %1929 = vperm.xlu0 %1928, %v1731
        %v1930 = vpop.permute.xlu0 %1929
        %v1932 = vadd.f32 %v1924, %v1930
        %v1933 = vmax.f32 %v1932, 0.0
        %v1934 = vld [vmem:[%s19] sm:$0x1]
        %v1935 = vld [vmem:[#allocation3] sm:$0x1]
        %1937 = vset.pattern.permute.xlu0 0
        %1938 = vperm.xlu0 %1937, %v1935
        %v1939 = vpop.permute.xlu0 %1938
        %v1941 = vlaneseq
        %v1942 = vshrl.u32 %v1941, 7
        %v1943 = vsub.s32 0, %v1942
        %v1944 = vrot.slane %v1939, %v1943
        %v1946 = vsel %vm926, %v1934, 0
        %1948 = vmatprep.subr.mxu0 0.0
        %1949 = vmatpush1.msra.mxu0 %v1933
        %1950 = vmatprep.subr.mxu0 0.0
        %1951 = vmatpush1.msra.mxu0 0.0
        %1952 = vmatprep.subr.mxu0 0.0
        %1953 = vmatpush1.msra.mxu0 0.0
        %1954 = vmatprep.subr.mxu0 0.0
        %1955 = vmatpush1.msra.mxu0 0.0
        %1956 = vmatprep.subr.mxu0 0.0
        %1957 = vmatpush1.msra.mxu0 0.0
        %1958 = vmatprep.subr.mxu0 0.0
        %1959 = vmatpush1.msra.mxu0 0.0
        %1960 = vmatprep.subr.mxu0 0.0
        %1961 = vmatpush1.msra.mxu0 0.0
        %1962 = vmatprep.subr.mxu0 0.0
        %1963 = vmatpush1.msra.mxu0 0.0
        %1964 = vmatprep.subr.mxu0 0.0
        %1965 = vmatpush1.msra.mxu0 0.0
        %1966 = vmatprep.subr.mxu0 0.0
        %1967 = vmatpush1.msra.mxu0 0.0
        %1968 = vmatprep.subr.mxu0 0.0
        %1969 = vmatpush1.msra.mxu0 0.0
        %1970 = vmatprep.subr.mxu0 0.0
        %1971 = vmatpush1.msra.mxu0 0.0
        %1972 = vmatprep.subr.mxu0 0.0
        %1973 = vmatpush1.msra.mxu0 0.0
        %1974 = vmatprep.subr.mxu0 0.0
        %1975 = vmatpush1.msra.mxu0 0.0
        %1976 = vmatprep.subr.mxu0 0.0
        %1977 = vmatpush1.msra.mxu0 0.0
        %1978 = vmatprep.subr.mxu0 0.0
        %1979 = vmatpush1.msra.mxu0 0.0
        %1980 = vmatprep.subr.mxu0 0.0
        %1981 = vmatpush1.msra.mxu0 0.0
        %1982 = vmatprep.subr.mxu0 0.0
        %1983 = vmatpush1.msra.mxu0 0.0
        %1984 = vmatprep.subr.mxu0 0.0
        %1985 = vmatpush1.msra.mxu0 0.0
        %1986 = vmatprep.subr.mxu0 0.0
        %1987 = vmatpush1.msra.mxu0 0.0
        %1988 = vmatprep.subr.mxu0 0.0
        %1989 = vmatpush1.msra.mxu0 0.0
        %1990 = vmatprep.subr.mxu0 0.0
        %1991 = vmatpush1.msra.mxu0 0.0
        %1992 = vmatprep.subr.mxu0 0.0
        %1993 = vmatpush1.msra.mxu0 0.0
        %1994 = vmatprep.subr.mxu0 0.0
        %1995 = vmatpush1.msra.mxu0 0.0
        %1996 = vmatprep.subr.mxu0 0.0
        %1997 = vmatpush1.msra.mxu0 0.0
        %1998 = vmatprep.subr.mxu0 0.0
        %1999 = vmatpush1.msra.mxu0 0.0
        %2000 = vmatprep.subr.mxu0 0.0
        %2001 = vmatpush1.msra.mxu0 0.0
        %2002 = vmatprep.subr.mxu0 0.0
        %2003 = vmatpush1.msra.mxu0 0.0
        %2004 = vmatprep.subr.mxu0 0.0
        %2005 = vmatpush1.msra.mxu0 0.0
        %2006 = vmatprep.subr.mxu0 0.0
        %2007 = vmatpush1.msra.mxu0 0.0
        %2008 = vmatprep.subr.mxu0 0.0
        %2009 = vmatpush1.msra.mxu0 0.0
        %2010 = vmatprep.subr.mxu0 0.0
        %2011 = vmatpush1.msra.mxu0 0.0
        %2012 = vmatprep.mubr.f32.mxu0 0.0
        %2013 = vmatmul.mubr.f32.gmra.mrb[0].mxu0 %v1946
        %v2014 = vpop.f32.mrb[0].mxu0
        %v2015 = vadd.f32 %v1944, %v2014
        %v2016 = vpop.f32.mrb[0].mxu0
        %2017 = vdwg.mxu0
        %vm2018 = vcmask 253952
        %2019 = vst.msk [vmem:[%s648] sm:$0x1] %vm2018, %v2015
        %s2020 = sand.u32 %s491, 1
        %s2021 = scalar_lea.sflag [#allocation5], %s2020
        %s2022 = sand.u32 %s491, 1
        %s2023 = scalar_lea.vmem [#allocation4], %s2022
        // Predicated region
        $region105: #{_lambda_.1} parent=103 // pred_check
          %p2024 = pneg %p501
        $region106: #{_lambda_.1} parent=103 // pred_check_branch
          %2026 = sbr.rel (%p2024) target = $region108
        $region107: #{_lambda_.1} parent=103 // pred_region
          %s2028 = ssub.s32 16, 16
          %2029 = vsyncadd %s2021, %s2028
          %s2030 = smul.addr %s37, 16
          %s2031 = scalar_lea.hbm %s21, %s2030
          %s2033 = sshll.u32 %s2023, 4
          %s2034 = int_to_ptr.vmem [resolvable:$true] %s2033
          %2036 = dma.vmem_to_hbm [thread:$0]  %s2034, 16, %s2031, %s2021
        $region108: #{_lambda_.1} parent=103 // pred_fallthru
          _
      $region104: #{_lambda_.1} parent=5 // pred_fallthru
        _
      %p2037 = scmp.le.s32.totalorder 2, %s32
      // Predicated region
      $region109: #{_lambda_.1} parent=5 // pred_check
        %p2038 = pneg %p2037
      $region110: #{_lambda_.1} parent=5 // pred_check_branch
        %2040 = sbr.rel (%p2038) target = $region112
      $region111: #{_lambda_.1} parent=5 // pred_region
        %s2041 = ssub.s32 %s32, 2
        // Predicated region
        $region113: #{_lambda_.1} parent=111 // pred_check
          %p2042 = pneg %p507
        $region114: #{_lambda_.1} parent=111 // pred_check_branch
          %2044 = sbr.rel (%p2042) target = $region116
        $region115: #{_lambda_.1} parent=111 // pred_region
          %s2045 = sand.u32 %s492, 1
          %s2046 = scalar_lea.sflag [#allocation5], %s2045
          %s2047 = sand.u32 %s492, 1
          %s2048 = scalar_lea.vmem [#allocation4], %s2047
          %2049 = dma.done %s2046, 16
        $region116: #{_lambda_.1} parent=111 // pred_fallthru
          _
      $region112: #{_lambda_.1} parent=5 // pred_fallthru
        _
    $region6: #{_lambda_.1} parent=1 // loop_footer
      %s36 = sadd.s32 1, %s32
    $region7: #{_lambda_.1} parent=1 // loop_footer_branch
      %31 = sbr.rel target = $region3
    $region8: #{_lambda_.1} parent=1 // loop_exit
      _
    %2050 = vsyncpa [#allocation5], 1
    %s2051 = scalar_lea.sflag [#allocation5], 1
    %2052 = vsyncpa %s2051, 1

</llo_original>
